<compile_context>
chip_gen: v7x
topology: tpu7x:2x2x1
jax: 0.10.0
libtpu: 0.0.40
codegen_flags: <defaults>
</compile_context>

<pallas_src>
import math

import jax
import jax.numpy as jnp
from jax.experimental import pallas as pl
from jax.experimental.pallas import tpu as pltpu  # noqa: F401  (TPU backend)

# ---- model dims -------------------------------------------------------------
B, T, H = 2, 8, 32          # batch, max_time_step, hidden
NH, HD = 4, 8               # heads, head dim (NH * HD == H)
I = 64                      # FFN intermediate size
VOCAB = 50
NLAYERS = 2
EPS = 1e-12                 # BERT LayerNorm eps
BT = B * T


def _layer_norm(x, g, b):
    mu = jnp.mean(x, axis=-1, keepdims=True)
    var = jnp.mean((x - mu) ** 2, axis=-1, keepdims=True)
    return (x - mu) * jax.lax.rsqrt(var + EPS) * g + b


# ---- fully fused forward kernel (no grid, everything VMEM-resident) ---------
def fused_bert_kernel(bias_ref, xemb_ref, embln_ref, wqkv_ref, bqkv_ref, wo_ref,
                      w1_ref, b1_ref, w2_ref, bvec_ref, poolw_ref, poolb_ref,
                      words_ref, doc_ref):
    # Embedding LayerNorm seeds the activation.
    embln = embln_ref[...]                               # [2, H]: (gamma; beta)
    x = _layer_norm(xemb_ref[...], embln[0:1, :], embln[1:2, :])   # [BT, H] f32

    attn_bias = bias_ref[...]                            # [BT, BT] additive mask
    scale = 1.0 / math.sqrt(HD)

    for l in range(NLAYERS):                             # static layer unroll
        bvec = bvec_ref[l]                               # [6, H] packed vectors
        bo, g1, b1n = bvec[0:1, :], bvec[1:2, :], bvec[2:3, :]
        b2, g2, b2n = bvec[3:4, :], bvec[4:5, :], bvec[5:6, :]

        # ---- fused QKV projection: one [H, 3H] bf16 matmul -------------------
        qkv = jnp.dot(x.astype(jnp.bfloat16), wqkv_ref[l],
                      preferred_element_type=jnp.float32) + bqkv_ref[l]  # [BT,3H]
        q, k, v = qkv[:, 0:H], qkv[:, H:2 * H], qkv[:, 2 * H:3 * H]

        # ---- multi-head attention (whole batch shares one [BT,BT] per head) --
        ctxs = []
        for h in range(NH):                              # static head loop
            sl = slice(h * HD, (h + 1) * HD)
            qh = q[:, sl].astype(jnp.bfloat16)
            kh = k[:, sl].astype(jnp.bfloat16)
            vh = v[:, sl].astype(jnp.bfloat16)
            s = jax.lax.dot_general(qh, kh, (((1,), (1,)), ((), ())),
                                    preferred_element_type=jnp.float32) * scale
            s = s + attn_bias                            # block-diag mask (add)
            m = jnp.max(s, axis=-1, keepdims=True)
            e = jnp.exp(s - m)
            p = e * pl.reciprocal(jnp.sum(e, axis=-1, keepdims=True), approx=True)
            ctxs.append(jnp.dot(p.astype(jnp.bfloat16), vh,
                                preferred_element_type=jnp.float32))     # [BT,HD]
        # Single K=H output projection instead of NH K=HD dots.
        ctx = jnp.concatenate(ctxs, axis=-1).astype(jnp.bfloat16)        # [BT, H]
        attn = jnp.dot(ctx, wo_ref[l],
                       preferred_element_type=jnp.float32) + bo          # [BT, H]

        h1 = _layer_norm(x + attn, g1, b1n)

        # ---- FFN --------------------------------------------------------------
        ffn = jnp.dot(h1.astype(jnp.bfloat16), w1_ref[l],
                      preferred_element_type=jnp.float32) + b1_ref[l]
        ffn = jax.nn.gelu(ffn, approximate=True)
        ffn = jnp.dot(ffn.astype(jnp.bfloat16), w2_ref[l],
                      preferred_element_type=jnp.float32) + b2
        x = _layer_norm(h1 + ffn, g2, b2n)

    # ---- outputs: wordEmbeddings + pooler / documentEmbedding -----------------
    words_ref[...] = x
    # CLS rows (token 0 of every batch element) via one sublane-strided read.
    cls = words_ref[pl.ds(0, B, stride=T), :]                            # [B, H]
    pooled = jnp.tanh(jnp.dot(cls.astype(jnp.bfloat16), poolw_ref[...],
                              preferred_element_type=jnp.float32)
                      + poolb_ref[...])
    doc_ref[...] = pooled + cls                  # sentenceVector + words[:, 0, :]


# ---- pallas_call wrapper ------------------------------------------------------
def bert_encoder_forward(source, params):
    """source: int32 [B, T] token ids.
    Returns (wordEmbeddings [B,T,H], documentEmbedding [B,1,H])."""
    # Embedding lookups (glue: gathers stay in plain JAX).
    we = params["word_emb"][source]                         # [B, T, H]
    pe = params["pos_emb"][: source.shape[1]][None, :, :]   # [1, T, H]
    te = params["type_emb"][0][None, None, :]               # [1, 1, H]
    x_emb = (we + pe + te).astype(jnp.float32).reshape(BT, H)

    # Additive block-diagonal attention bias, built once outside the kernel.
    rows = jnp.arange(BT, dtype=jnp.int32) // T
    attn_bias = jnp.where(rows[:, None] == rows[None, :], 0.0, -1e9
                          ).astype(jnp.float32)             # [BT, BT]

    ins = (attn_bias, x_emb, params["emb_ln"], params["wqkv"], params["bqkv"],
           params["wo"], params["w1"], params["b1"], params["w2"],
           params["bvec"], params["pool_w"], params["pool_b"])

    # No grid: whole arrays are VMEM-resident for the single kernel invocation.
    words, doc = pl.pallas_call(
        fused_bert_kernel,
        out_shape=(jax.ShapeDtypeStruct((BT, H), jnp.float32),
                   jax.ShapeDtypeStruct((B, H), jnp.float32)),
    )(*ins)

    word_embeddings = words.reshape(B, T, H)          # .detach() is a no-op here
    document_embedding = doc[:, None, :]              # unsqueeze(1) -> [B, 1, H]
    return word_embeddings, document_embedding


# ---- deterministic synthetic BERT parameters ---------------------------------
def init_params(key):
    def nrm(k, shape, dtype=jnp.float32):
        return (0.02 * jax.random.normal(k, shape, dtype=jnp.float32)).astype(dtype)

    ks = iter(jax.random.split(key, 12))
    # packed per-layer vectors: rows = [attn-out bias, ln1 g, ln1 b,
    #                                   ffn-out bias, ln2 g, ln2 b]
    bvec = jnp.zeros((NLAYERS, 6, H), jnp.float32)
    bvec = bvec.at[:, 1, :].set(1.0).at[:, 4, :].set(1.0)
    emb_ln = jnp.stack([jnp.ones((H,), jnp.float32), jnp.zeros((H,), jnp.float32)])
    return {
        "word_emb": nrm(next(ks), (VOCAB, H)),
        "pos_emb": nrm(next(ks), (T, H)),
        "type_emb": nrm(next(ks), (2, H)),
        "emb_ln": emb_ln,                                        # [2, H] (gamma; beta)
        "wqkv": nrm(next(ks), (NLAYERS, H, 3 * H), jnp.bfloat16),
        "bqkv": nrm(next(ks), (NLAYERS, 1, 3 * H)),
        "wo": nrm(next(ks), (NLAYERS, H, H), jnp.bfloat16),      # head-major rows
        "w1": nrm(next(ks), (NLAYERS, H, I), jnp.bfloat16),
        "b1": nrm(next(ks), (NLAYERS, 1, I)),
        "w2": nrm(next(ks), (NLAYERS, I, H), jnp.bfloat16),
        "bvec": bvec,
        "pool_w": nrm(next(ks), (H, H), jnp.bfloat16),
        "pool_b": nrm(next(ks), (1, H)),
    }


if __name__ == "__main__":
    root = jax.random.PRNGKey(0)
    pkey, skey = jax.random.split(root)
    params = init_params(pkey)
    source = jax.random.randint(skey, (B, T), 0, VOCAB, dtype=jnp.int32)

    fwd = jax.jit(bert_encoder_forward)
    word_embeddings, document_embedding = fwd(source, params)
    jax.block_until_ready((word_embeddings, document_embedding))

    assert word_embeddings.shape == (B, T, H)
    assert document_embedding.shape == (B, 1, H)
    assert bool(jnp.all(jnp.isfinite(word_embeddings)))
    assert bool(jnp.all(jnp.isfinite(document_embedding)))
    print("KERNEL_OK")
</pallas_src>

<mosaic_0001>
module attributes {stable_mosaic.version = 11 : i64} {
  func.func @fused_bert_kernel(%arg0: memref<16x16xf32, #tpu.memory_space<vmem>>, %arg1: memref<16x32xf32, #tpu.memory_space<vmem>>, %arg2: memref<2x32xf32, #tpu.memory_space<vmem>>, %arg3: memref<2x32x96xbf16, #tpu.memory_space<vmem>>, %arg4: memref<2x1x96xf32, #tpu.memory_space<vmem>>, %arg5: memref<2x32x32xbf16, #tpu.memory_space<vmem>>, %arg6: memref<2x32x64xbf16, #tpu.memory_space<vmem>>, %arg7: memref<2x1x64xf32, #tpu.memory_space<vmem>>, %arg8: memref<2x64x32xbf16, #tpu.memory_space<vmem>>, %arg9: memref<2x6x32xf32, #tpu.memory_space<vmem>>, %arg10: memref<32x32xbf16, #tpu.memory_space<vmem>>, %arg11: memref<1x32xf32, #tpu.memory_space<vmem>>, %arg12: memref<16x32xf32, #tpu.memory_space<vmem>>, %arg13: memref<2x32xf32, #tpu.memory_space<vmem>>) attributes {dimension_semantics = [], scalar_prefetch = 0 : i64, scratch_operands = 0 : i64, tpu.core_type = #tpu.core_type<tc>} {
    %c0 = arith.constant 0 : index
    %c0_0 = arith.constant 0 : index
    %0 = vector.load %arg2[%c0, %c0_0] : memref<2x32xf32, #tpu.memory_space<vmem>>, vector<2x32xf32>
    %c0_1 = arith.constant 0 : index
    %c0_2 = arith.constant 0 : index
    %1 = vector.load %arg1[%c0_1, %c0_2] : memref<16x32xf32, #tpu.memory_space<vmem>>, vector<16x32xf32>
    %2 = vector.extract_strided_slice %0 {offsets = [0, 0], sizes = [1, 32], strides = [1, 1]} : vector<2x32xf32> to vector<1x32xf32>
    %3 = vector.extract_strided_slice %0 {offsets = [1, 0], sizes = [1, 32], strides = [1, 1]} : vector<2x32xf32> to vector<1x32xf32>
    %cst = arith.constant dense<0.000000e+00> : vector<16xf32>
    %4 = vector.multi_reduction <add>, %1, %cst [1] : vector<16x32xf32> to vector<16xf32>
    %5 = vector.shape_cast %4 : vector<16xf32> to vector<16x1xf32>
    %cst_3 = arith.constant 3.200000e+01 : f32
    %6 = vector.broadcast %cst_3 : f32 to vector<16x1xf32>
    %7 = arith.divf %5, %6 : vector<16x1xf32>
    %8 = vector.broadcast %7 : vector<16x1xf32> to vector<16x32xf32>
    %9 = arith.subf %1, %8 : vector<16x32xf32>
    %10 = arith.mulf %9, %9 : vector<16x32xf32>
    %cst_4 = arith.constant dense<0.000000e+00> : vector<16xf32>
    %11 = vector.multi_reduction <add>, %10, %cst_4 [1] : vector<16x32xf32> to vector<16xf32>
    %12 = vector.shape_cast %11 : vector<16xf32> to vector<16x1xf32>
    %cst_5 = arith.constant 3.200000e+01 : f32
    %13 = vector.broadcast %cst_5 : f32 to vector<16x1xf32>
    %14 = arith.divf %12, %13 : vector<16x1xf32>
    %15 = vector.broadcast %7 : vector<16x1xf32> to vector<16x32xf32>
    %16 = arith.subf %1, %15 : vector<16x32xf32>
    %cst_6 = arith.constant 9.99999996E-13 : f32
    %17 = vector.broadcast %cst_6 : f32 to vector<16x1xf32>
    %18 = arith.addf %14, %17 : vector<16x1xf32>
    %19 = math.rsqrt %18 : vector<16x1xf32>
    %20 = vector.broadcast %19 : vector<16x1xf32> to vector<16x32xf32>
    %21 = arith.mulf %16, %20 : vector<16x32xf32>
    %22 = vector.broadcast %2 : vector<1x32xf32> to vector<16x32xf32>
    %23 = arith.mulf %21, %22 : vector<16x32xf32>
    %24 = vector.broadcast %3 : vector<1x32xf32> to vector<16x32xf32>
    %25 = arith.addf %23, %24 : vector<16x32xf32>
    %c0_7 = arith.constant 0 : index
    %c0_8 = arith.constant 0 : index
    %26 = vector.load %arg0[%c0_7, %c0_8] : memref<16x16xf32, #tpu.memory_space<vmem>>, vector<16x16xf32>
    %c0_9 = arith.constant 0 : index
    %c0_10 = arith.constant 0 : index
    %c0_11 = arith.constant 0 : index
    %27 = vector.load %arg9[%c0_9, %c0_10, %c0_11] : memref<2x6x32xf32, #tpu.memory_space<vmem>>, vector<1x6x32xf32>
    %28 = vector.shape_cast %27 : vector<1x6x32xf32> to vector<6x32xf32>
    %29 = vector.extract_strided_slice %28 {offsets = [0, 0], sizes = [1, 32], strides = [1, 1]} : vector<6x32xf32> to vector<1x32xf32>
    %30 = vector.extract_strided_slice %28 {offsets = [1, 0], sizes = [1, 32], strides = [1, 1]} : vector<6x32xf32> to vector<1x32xf32>
    %31 = vector.extract_strided_slice %28 {offsets = [2, 0], sizes = [1, 32], strides = [1, 1]} : vector<6x32xf32> to vector<1x32xf32>
    %32 = vector.extract_strided_slice %28 {offsets = [3, 0], sizes = [1, 32], strides = [1, 1]} : vector<6x32xf32> to vector<1x32xf32>
    %33 = vector.extract_strided_slice %28 {offsets = [4, 0], sizes = [1, 32], strides = [1, 1]} : vector<6x32xf32> to vector<1x32xf32>
    %34 = vector.extract_strided_slice %28 {offsets = [5, 0], sizes = [1, 32], strides = [1, 1]} : vector<6x32xf32> to vector<1x32xf32>
    %35 = arith.truncf %25 : vector<16x32xf32> to vector<16x32xbf16>
    %c0_12 = arith.constant 0 : index
    %c0_13 = arith.constant 0 : index
    %c0_14 = arith.constant 0 : index
    %36 = vector.load %arg3[%c0_12, %c0_13, %c0_14] : memref<2x32x96xbf16, #tpu.memory_space<vmem>>, vector<1x32x96xbf16>
    %37 = vector.shape_cast %36 : vector<1x32x96xbf16> to vector<32x96xbf16>
    %cst_15 = arith.constant dense<0.000000e+00> : vector<16x96xf32>
    %38 = tpu.matmul %35, %37, %cst_15 {dimension_numbers = #tpu.dot_dimension_numbers<[1], [0], [0], [1], [0, 0, 1, 1], [], []>} : vector<16x32xbf16>, vector<32x96xbf16>, vector<16x96xf32> -> vector<16x96xf32>
    %c0_16 = arith.constant 0 : index
    %c0_17 = arith.constant 0 : index
    %c0_18 = arith.constant 0 : index
    %39 = vector.load %arg4[%c0_16, %c0_17, %c0_18] : memref<2x1x96xf32, #tpu.memory_space<vmem>>, vector<1x1x96xf32>
    %40 = vector.shape_cast %39 : vector<1x1x96xf32> to vector<1x96xf32>
    %41 = vector.broadcast %40 : vector<1x96xf32> to vector<16x96xf32>
    %42 = arith.addf %38, %41 : vector<16x96xf32>
    %43 = vector.extract_strided_slice %42 {offsets = [0, 0], sizes = [16, 32], strides = [1, 1]} : vector<16x96xf32> to vector<16x32xf32>
    %44 = vector.extract_strided_slice %42 {offsets = [0, 32], sizes = [16, 32], strides = [1, 1]} : vector<16x96xf32> to vector<16x32xf32>
    %45 = vector.extract_strided_slice %42 {offsets = [0, 64], sizes = [16, 32], strides = [1, 1]} : vector<16x96xf32> to vector<16x32xf32>
    %46 = vector.extract_strided_slice %43 {offsets = [0, 0], sizes = [16, 8], strides = [1, 1]} : vector<16x32xf32> to vector<16x8xf32>
    %47 = arith.truncf %46 : vector<16x8xf32> to vector<16x8xbf16>
    %48 = vector.extract_strided_slice %44 {offsets = [0, 0], sizes = [16, 8], strides = [1, 1]} : vector<16x32xf32> to vector<16x8xf32>
    %49 = arith.truncf %48 : vector<16x8xf32> to vector<16x8xbf16>
    %50 = vector.extract_strided_slice %45 {offsets = [0, 0], sizes = [16, 8], strides = [1, 1]} : vector<16x32xf32> to vector<16x8xf32>
    %51 = arith.truncf %50 : vector<16x8xf32> to vector<16x8xbf16>
    %cst_19 = arith.constant dense<0.000000e+00> : vector<16x16xf32>
    %52 = tpu.matmul %47, %49, %cst_19 {dimension_numbers = #tpu.dot_dimension_numbers<[1], [1], [0], [0], [0, 0, 1, 0], [], []>} : vector<16x8xbf16>, vector<16x8xbf16>, vector<16x16xf32> -> vector<16x16xf32>
    %cst_20 = arith.constant 0.353553385 : f32
    %53 = vector.broadcast %cst_20 : f32 to vector<16x16xf32>
    %54 = arith.mulf %52, %53 : vector<16x16xf32>
    %55 = arith.addf %54, %26 : vector<16x16xf32>
    %cst_21 = arith.constant dense<0xFF800000> : vector<16xf32>
    %56 = vector.multi_reduction <maximumf>, %55, %cst_21 [1] : vector<16x16xf32> to vector<16xf32>
    %57 = vector.shape_cast %56 : vector<16xf32> to vector<16x1xf32>
    %58 = vector.broadcast %57 : vector<16x1xf32> to vector<16x16xf32>
    %59 = arith.subf %55, %58 : vector<16x16xf32>
    %60 = math.exp %59 : vector<16x16xf32>
    %cst_22 = arith.constant dense<0.000000e+00> : vector<16xf32>
    %61 = vector.multi_reduction <add>, %60, %cst_22 [1] : vector<16x16xf32> to vector<16xf32>
    %62 = vector.shape_cast %61 : vector<16xf32> to vector<16x1xf32>
    %63 = tpu.reciprocal %62 {approx = true} : vector<16x1xf32> -> vector<16x1xf32>
    %64 = vector.broadcast %63 : vector<16x1xf32> to vector<16x16xf32>
    %65 = arith.mulf %60, %64 : vector<16x16xf32>
    %66 = arith.truncf %65 : vector<16x16xf32> to vector<16x16xbf16>
    %cst_23 = arith.constant dense<0.000000e+00> : vector<16x8xf32>
    %67 = tpu.matmul %66, %51, %cst_23 {dimension_numbers = #tpu.dot_dimension_numbers<[1], [0], [0], [1], [0, 0, 1, 1], [], []>} : vector<16x16xbf16>, vector<16x8xbf16>, vector<16x8xf32> -> vector<16x8xf32>
    %68 = vector.extract_strided_slice %43 {offsets = [0, 8], sizes = [16, 8], strides = [1, 1]} : vector<16x32xf32> to vector<16x8xf32>
    %69 = arith.truncf %68 : vector<16x8xf32> to vector<16x8xbf16>
    %70 = vector.extract_strided_slice %44 {offsets = [0, 8], sizes = [16, 8], strides = [1, 1]} : vector<16x32xf32> to vector<16x8xf32>
    %71 = arith.truncf %70 : vector<16x8xf32> to vector<16x8xbf16>
    %72 = vector.extract_strided_slice %45 {offsets = [0, 8], sizes = [16, 8], strides = [1, 1]} : vector<16x32xf32> to vector<16x8xf32>
    %73 = arith.truncf %72 : vector<16x8xf32> to vector<16x8xbf16>
    %cst_24 = arith.constant dense<0.000000e+00> : vector<16x16xf32>
    %74 = tpu.matmul %69, %71, %cst_24 {dimension_numbers = #tpu.dot_dimension_numbers<[1], [1], [0], [0], [0, 0, 1, 0], [], []>} : vector<16x8xbf16>, vector<16x8xbf16>, vector<16x16xf32> -> vector<16x16xf32>
    %cst_25 = arith.constant 0.353553385 : f32
    %75 = vector.broadcast %cst_25 : f32 to vector<16x16xf32>
    %76 = arith.mulf %74, %75 : vector<16x16xf32>
    %77 = arith.addf %76, %26 : vector<16x16xf32>
    %cst_26 = arith.constant dense<0xFF800000> : vector<16xf32>
    %78 = vector.multi_reduction <maximumf>, %77, %cst_26 [1] : vector<16x16xf32> to vector<16xf32>
    %79 = vector.shape_cast %78 : vector<16xf32> to vector<16x1xf32>
    %80 = vector.broadcast %79 : vector<16x1xf32> to vector<16x16xf32>
    %81 = arith.subf %77, %80 : vector<16x16xf32>
    %82 = math.exp %81 : vector<16x16xf32>
    %cst_27 = arith.constant dense<0.000000e+00> : vector<16xf32>
    %83 = vector.multi_reduction <add>, %82, %cst_27 [1] : vector<16x16xf32> to vector<16xf32>
    %84 = vector.shape_cast %83 : vector<16xf32> to vector<16x1xf32>
    %85 = tpu.reciprocal %84 {approx = true} : vector<16x1xf32> -> vector<16x1xf32>
    %86 = vector.broadcast %85 : vector<16x1xf32> to vector<16x16xf32>
    %87 = arith.mulf %82, %86 : vector<16x16xf32>
    %88 = arith.truncf %87 : vector<16x16xf32> to vector<16x16xbf16>
    %cst_28 = arith.constant dense<0.000000e+00> : vector<16x8xf32>
    %89 = tpu.matmul %88, %73, %cst_28 {dimension_numbers = #tpu.dot_dimension_numbers<[1], [0], [0], [1], [0, 0, 1, 1], [], []>} : vector<16x16xbf16>, vector<16x8xbf16>, vector<16x8xf32> -> vector<16x8xf32>
    %90 = vector.extract_strided_slice %43 {offsets = [0, 16], sizes = [16, 8], strides = [1, 1]} : vector<16x32xf32> to vector<16x8xf32>
    %91 = arith.truncf %90 : vector<16x8xf32> to vector<16x8xbf16>
    %92 = vector.extract_strided_slice %44 {offsets = [0, 16], sizes = [16, 8], strides = [1, 1]} : vector<16x32xf32> to vector<16x8xf32>
    %93 = arith.truncf %92 : vector<16x8xf32> to vector<16x8xbf16>
    %94 = vector.extract_strided_slice %45 {offsets = [0, 16], sizes = [16, 8], strides = [1, 1]} : vector<16x32xf32> to vector<16x8xf32>
    %95 = arith.truncf %94 : vector<16x8xf32> to vector<16x8xbf16>
    %cst_29 = arith.constant dense<0.000000e+00> : vector<16x16xf32>
    %96 = tpu.matmul %91, %93, %cst_29 {dimension_numbers = #tpu.dot_dimension_numbers<[1], [1], [0], [0], [0, 0, 1, 0], [], []>} : vector<16x8xbf16>, vector<16x8xbf16>, vector<16x16xf32> -> vector<16x16xf32>
    %cst_30 = arith.constant 0.353553385 : f32
    %97 = vector.broadcast %cst_30 : f32 to vector<16x16xf32>
    %98 = arith.mulf %96, %97 : vector<16x16xf32>
    %99 = arith.addf %98, %26 : vector<16x16xf32>
    %cst_31 = arith.constant dense<0xFF800000> : vector<16xf32>
    %100 = vector.multi_reduction <maximumf>, %99, %cst_31 [1] : vector<16x16xf32> to vector<16xf32>
    %101 = vector.shape_cast %100 : vector<16xf32> to vector<16x1xf32>
    %102 = vector.broadcast %101 : vector<16x1xf32> to vector<16x16xf32>
    %103 = arith.subf %99, %102 : vector<16x16xf32>
    %104 = math.exp %103 : vector<16x16xf32>
    %cst_32 = arith.constant dense<0.000000e+00> : vector<16xf32>
    %105 = vector.multi_reduction <add>, %104, %cst_32 [1] : vector<16x16xf32> to vector<16xf32>
    %106 = vector.shape_cast %105 : vector<16xf32> to vector<16x1xf32>
    %107 = tpu.reciprocal %106 {approx = true} : vector<16x1xf32> -> vector<16x1xf32>
    %108 = vector.broadcast %107 : vector<16x1xf32> to vector<16x16xf32>
    %109 = arith.mulf %104, %108 : vector<16x16xf32>
    %110 = arith.truncf %109 : vector<16x16xf32> to vector<16x16xbf16>
    %cst_33 = arith.constant dense<0.000000e+00> : vector<16x8xf32>
    %111 = tpu.matmul %110, %95, %cst_33 {dimension_numbers = #tpu.dot_dimension_numbers<[1], [0], [0], [1], [0, 0, 1, 1], [], []>} : vector<16x16xbf16>, vector<16x8xbf16>, vector<16x8xf32> -> vector<16x8xf32>
    %112 = vector.extract_strided_slice %43 {offsets = [0, 24], sizes = [16, 8], strides = [1, 1]} : vector<16x32xf32> to vector<16x8xf32>
    %113 = arith.truncf %112 : vector<16x8xf32> to vector<16x8xbf16>
    %114 = vector.extract_strided_slice %44 {offsets = [0, 24], sizes = [16, 8], strides = [1, 1]} : vector<16x32xf32> to vector<16x8xf32>
    %115 = arith.truncf %114 : vector<16x8xf32> to vector<16x8xbf16>
    %116 = vector.extract_strided_slice %45 {offsets = [0, 24], sizes = [16, 8], strides = [1, 1]} : vector<16x32xf32> to vector<16x8xf32>
    %117 = arith.truncf %116 : vector<16x8xf32> to vector<16x8xbf16>
    %cst_34 = arith.constant dense<0.000000e+00> : vector<16x16xf32>
    %118 = tpu.matmul %113, %115, %cst_34 {dimension_numbers = #tpu.dot_dimension_numbers<[1], [1], [0], [0], [0, 0, 1, 0], [], []>} : vector<16x8xbf16>, vector<16x8xbf16>, vector<16x16xf32> -> vector<16x16xf32>
    %cst_35 = arith.constant 0.353553385 : f32
    %119 = vector.broadcast %cst_35 : f32 to vector<16x16xf32>
    %120 = arith.mulf %118, %119 : vector<16x16xf32>
    %121 = arith.addf %120, %26 : vector<16x16xf32>
    %cst_36 = arith.constant dense<0xFF800000> : vector<16xf32>
    %122 = vector.multi_reduction <maximumf>, %121, %cst_36 [1] : vector<16x16xf32> to vector<16xf32>
    %123 = vector.shape_cast %122 : vector<16xf32> to vector<16x1xf32>
    %124 = vector.broadcast %123 : vector<16x1xf32> to vector<16x16xf32>
    %125 = arith.subf %121, %124 : vector<16x16xf32>
    %126 = math.exp %125 : vector<16x16xf32>
    %cst_37 = arith.constant dense<0.000000e+00> : vector<16xf32>
    %127 = vector.multi_reduction <add>, %126, %cst_37 [1] : vector<16x16xf32> to vector<16xf32>
    %128 = vector.shape_cast %127 : vector<16xf32> to vector<16x1xf32>
    %129 = tpu.reciprocal %128 {approx = true} : vector<16x1xf32> -> vector<16x1xf32>
    %130 = vector.broadcast %129 : vector<16x1xf32> to vector<16x16xf32>
    %131 = arith.mulf %126, %130 : vector<16x16xf32>
    %132 = arith.truncf %131 : vector<16x16xf32> to vector<16x16xbf16>
    %cst_38 = arith.constant dense<0.000000e+00> : vector<16x8xf32>
    %133 = tpu.matmul %132, %117, %cst_38 {dimension_numbers = #tpu.dot_dimension_numbers<[1], [0], [0], [1], [0, 0, 1, 1], [], []>} : vector<16x16xbf16>, vector<16x8xbf16>, vector<16x8xf32> -> vector<16x8xf32>
    %134 = tpu.concatenate %67, %89, %111, %133 in 1 : vector<16x8xf32>, vector<16x8xf32>, vector<16x8xf32>, vector<16x8xf32> -> vector<16x32xf32>
    %135 = arith.truncf %134 : vector<16x32xf32> to vector<16x32xbf16>
    %c0_39 = arith.constant 0 : index
    %c0_40 = arith.constant 0 : index
    %c0_41 = arith.constant 0 : index
    %136 = vector.load %arg5[%c0_39, %c0_40, %c0_41] : memref<2x32x32xbf16, #tpu.memory_space<vmem>>, vector<1x32x32xbf16>
    %137 = vector.shape_cast %136 : vector<1x32x32xbf16> to vector<32x32xbf16>
    %cst_42 = arith.constant dense<0.000000e+00> : vector<16x32xf32>
    %138 = tpu.matmul %135, %137, %cst_42 {dimension_numbers = #tpu.dot_dimension_numbers<[1], [0], [0], [1], [0, 0, 1, 1], [], []>} : vector<16x32xbf16>, vector<32x32xbf16>, vector<16x32xf32> -> vector<16x32xf32>
    %139 = vector.broadcast %29 : vector<1x32xf32> to vector<16x32xf32>
    %140 = arith.addf %138, %139 : vector<16x32xf32>
    %141 = arith.addf %25, %140 : vector<16x32xf32>
    %cst_43 = arith.constant dense<0.000000e+00> : vector<16xf32>
    %142 = vector.multi_reduction <add>, %141, %cst_43 [1] : vector<16x32xf32> to vector<16xf32>
    %143 = vector.shape_cast %142 : vector<16xf32> to vector<16x1xf32>
    %cst_44 = arith.constant 3.200000e+01 : f32
    %144 = vector.broadcast %cst_44 : f32 to vector<16x1xf32>
    %145 = arith.divf %143, %144 : vector<16x1xf32>
    %146 = vector.broadcast %145 : vector<16x1xf32> to vector<16x32xf32>
    %147 = arith.subf %141, %146 : vector<16x32xf32>
    %148 = arith.mulf %147, %147 : vector<16x32xf32>
    %cst_45 = arith.constant dense<0.000000e+00> : vector<16xf32>
    %149 = vector.multi_reduction <add>, %148, %cst_45 [1] : vector<16x32xf32> to vector<16xf32>
    %150 = vector.shape_cast %149 : vector<16xf32> to vector<16x1xf32>
    %cst_46 = arith.constant 3.200000e+01 : f32
    %151 = vector.broadcast %cst_46 : f32 to vector<16x1xf32>
    %152 = arith.divf %150, %151 : vector<16x1xf32>
    %153 = vector.broadcast %145 : vector<16x1xf32> to vector<16x32xf32>
    %154 = arith.subf %141, %153 : vector<16x32xf32>
    %cst_47 = arith.constant 9.99999996E-13 : f32
    %155 = vector.broadcast %cst_47 : f32 to vector<16x1xf32>
    %156 = arith.addf %152, %155 : vector<16x1xf32>
    %157 = math.rsqrt %156 : vector<16x1xf32>
    %158 = vector.broadcast %157 : vector<16x1xf32> to vector<16x32xf32>
    %159 = arith.mulf %154, %158 : vector<16x32xf32>
    %160 = vector.broadcast %30 : vector<1x32xf32> to vector<16x32xf32>
    %161 = arith.mulf %159, %160 : vector<16x32xf32>
    %162 = vector.broadcast %31 : vector<1x32xf32> to vector<16x32xf32>
    %163 = arith.addf %161, %162 : vector<16x32xf32>
    %164 = arith.truncf %163 : vector<16x32xf32> to vector<16x32xbf16>
    %c0_48 = arith.constant 0 : index
    %c0_49 = arith.constant 0 : index
    %c0_50 = arith.constant 0 : index
    %165 = vector.load %arg6[%c0_48, %c0_49, %c0_50] : memref<2x32x64xbf16, #tpu.memory_space<vmem>>, vector<1x32x64xbf16>
    %166 = vector.shape_cast %165 : vector<1x32x64xbf16> to vector<32x64xbf16>
    %cst_51 = arith.constant dense<0.000000e+00> : vector<16x64xf32>
    %167 = tpu.matmul %164, %166, %cst_51 {dimension_numbers = #tpu.dot_dimension_numbers<[1], [0], [0], [1], [0, 0, 1, 1], [], []>} : vector<16x32xbf16>, vector<32x64xbf16>, vector<16x64xf32> -> vector<16x64xf32>
    %c0_52 = arith.constant 0 : index
    %c0_53 = arith.constant 0 : index
    %c0_54 = arith.constant 0 : index
    %168 = vector.load %arg7[%c0_52, %c0_53, %c0_54] : memref<2x1x64xf32, #tpu.memory_space<vmem>>, vector<1x1x64xf32>
    %169 = vector.shape_cast %168 : vector<1x1x64xf32> to vector<1x64xf32>
    %170 = vector.broadcast %169 : vector<1x64xf32> to vector<16x64xf32>
    %171 = arith.addf %167, %170 : vector<16x64xf32>
    %172 = arith.mulf %171, %171 : vector<16x64xf32>
    %173 = arith.mulf %171, %172 : vector<16x64xf32>
    %cst_55 = arith.constant 4.471500e-02 : f32
    %174 = vector.broadcast %cst_55 : f32 to vector<16x64xf32>
    %175 = arith.mulf %174, %173 : vector<16x64xf32>
    %176 = arith.addf %171, %175 : vector<16x64xf32>
    %cst_56 = arith.constant 0.797884583 : f32
    %177 = vector.broadcast %cst_56 : f32 to vector<16x64xf32>
    %178 = arith.mulf %177, %176 : vector<16x64xf32>
    %179 = math.tanh %178 : vector<16x64xf32>
    %cst_57 = arith.constant 1.000000e+00 : f32
    %180 = vector.broadcast %cst_57 : f32 to vector<16x64xf32>
    %181 = arith.addf %180, %179 : vector<16x64xf32>
    %cst_58 = arith.constant 5.000000e-01 : f32
    %182 = vector.broadcast %cst_58 : f32 to vector<16x64xf32>
    %183 = arith.mulf %182, %181 : vector<16x64xf32>
    %184 = arith.mulf %171, %183 : vector<16x64xf32>
    %185 = arith.truncf %184 : vector<16x64xf32> to vector<16x64xbf16>
    %c0_59 = arith.constant 0 : index
    %c0_60 = arith.constant 0 : index
    %c0_61 = arith.constant 0 : index
    %186 = vector.load %arg8[%c0_59, %c0_60, %c0_61] : memref<2x64x32xbf16, #tpu.memory_space<vmem>>, vector<1x64x32xbf16>
    %187 = vector.shape_cast %186 : vector<1x64x32xbf16> to vector<64x32xbf16>
    %cst_62 = arith.constant dense<0.000000e+00> : vector<16x32xf32>
    %188 = tpu.matmul %185, %187, %cst_62 {dimension_numbers = #tpu.dot_dimension_numbers<[1], [0], [0], [1], [0, 0, 1, 1], [], []>} : vector<16x64xbf16>, vector<64x32xbf16>, vector<16x32xf32> -> vector<16x32xf32>
    %189 = vector.broadcast %32 : vector<1x32xf32> to vector<16x32xf32>
    %190 = arith.addf %188, %189 : vector<16x32xf32>
    %191 = arith.addf %163, %190 : vector<16x32xf32>
    %cst_63 = arith.constant dense<0.000000e+00> : vector<16xf32>
    %192 = vector.multi_reduction <add>, %191, %cst_63 [1] : vector<16x32xf32> to vector<16xf32>
    %193 = vector.shape_cast %192 : vector<16xf32> to vector<16x1xf32>
    %cst_64 = arith.constant 3.200000e+01 : f32
    %194 = vector.broadcast %cst_64 : f32 to vector<16x1xf32>
    %195 = arith.divf %193, %194 : vector<16x1xf32>
    %196 = vector.broadcast %195 : vector<16x1xf32> to vector<16x32xf32>
    %197 = arith.subf %191, %196 : vector<16x32xf32>
    %198 = arith.mulf %197, %197 : vector<16x32xf32>
    %cst_65 = arith.constant dense<0.000000e+00> : vector<16xf32>
    %199 = vector.multi_reduction <add>, %198, %cst_65 [1] : vector<16x32xf32> to vector<16xf32>
    %200 = vector.shape_cast %199 : vector<16xf32> to vector<16x1xf32>
    %cst_66 = arith.constant 3.200000e+01 : f32
    %201 = vector.broadcast %cst_66 : f32 to vector<16x1xf32>
    %202 = arith.divf %200, %201 : vector<16x1xf32>
    %203 = vector.broadcast %195 : vector<16x1xf32> to vector<16x32xf32>
    %204 = arith.subf %191, %203 : vector<16x32xf32>
    %cst_67 = arith.constant 9.99999996E-13 : f32
    %205 = vector.broadcast %cst_67 : f32 to vector<16x1xf32>
    %206 = arith.addf %202, %205 : vector<16x1xf32>
    %207 = math.rsqrt %206 : vector<16x1xf32>
    %208 = vector.broadcast %207 : vector<16x1xf32> to vector<16x32xf32>
    %209 = arith.mulf %204, %208 : vector<16x32xf32>
    %210 = vector.broadcast %33 : vector<1x32xf32> to vector<16x32xf32>
    %211 = arith.mulf %209, %210 : vector<16x32xf32>
    %212 = vector.broadcast %34 : vector<1x32xf32> to vector<16x32xf32>
    %213 = arith.addf %211, %212 : vector<16x32xf32>
    %c1 = arith.constant 1 : index
    %c0_68 = arith.constant 0 : index
    %c0_69 = arith.constant 0 : index
    %214 = vector.load %arg9[%c1, %c0_68, %c0_69] : memref<2x6x32xf32, #tpu.memory_space<vmem>>, vector<1x6x32xf32>
    %215 = vector.shape_cast %214 : vector<1x6x32xf32> to vector<6x32xf32>
    %216 = vector.extract_strided_slice %215 {offsets = [0, 0], sizes = [1, 32], strides = [1, 1]} : vector<6x32xf32> to vector<1x32xf32>
    %217 = vector.extract_strided_slice %215 {offsets = [1, 0], sizes = [1, 32], strides = [1, 1]} : vector<6x32xf32> to vector<1x32xf32>
    %218 = vector.extract_strided_slice %215 {offsets = [2, 0], sizes = [1, 32], strides = [1, 1]} : vector<6x32xf32> to vector<1x32xf32>
    %219 = vector.extract_strided_slice %215 {offsets = [3, 0], sizes = [1, 32], strides = [1, 1]} : vector<6x32xf32> to vector<1x32xf32>
    %220 = vector.extract_strided_slice %215 {offsets = [4, 0], sizes = [1, 32], strides = [1, 1]} : vector<6x32xf32> to vector<1x32xf32>
    %221 = vector.extract_strided_slice %215 {offsets = [5, 0], sizes = [1, 32], strides = [1, 1]} : vector<6x32xf32> to vector<1x32xf32>
    %222 = arith.truncf %213 : vector<16x32xf32> to vector<16x32xbf16>
    %c1_70 = arith.constant 1 : index
    %c0_71 = arith.constant 0 : index
    %c0_72 = arith.constant 0 : index
    %223 = vector.load %arg3[%c1_70, %c0_71, %c0_72] : memref<2x32x96xbf16, #tpu.memory_space<vmem>>, vector<1x32x96xbf16>
    %224 = vector.shape_cast %223 : vector<1x32x96xbf16> to vector<32x96xbf16>
    %cst_73 = arith.constant dense<0.000000e+00> : vector<16x96xf32>
    %225 = tpu.matmul %222, %224, %cst_73 {dimension_numbers = #tpu.dot_dimension_numbers<[1], [0], [0], [1], [0, 0, 1, 1], [], []>} : vector<16x32xbf16>, vector<32x96xbf16>, vector<16x96xf32> -> vector<16x96xf32>
    %c1_74 = arith.constant 1 : index
    %c0_75 = arith.constant 0 : index
    %c0_76 = arith.constant 0 : index
    %226 = vector.load %arg4[%c1_74, %c0_75, %c0_76] : memref<2x1x96xf32, #tpu.memory_space<vmem>>, vector<1x1x96xf32>
    %227 = vector.shape_cast %226 : vector<1x1x96xf32> to vector<1x96xf32>
    %228 = vector.broadcast %227 : vector<1x96xf32> to vector<16x96xf32>
    %229 = arith.addf %225, %228 : vector<16x96xf32>
    %230 = vector.extract_strided_slice %229 {offsets = [0, 0], sizes = [16, 32], strides = [1, 1]} : vector<16x96xf32> to vector<16x32xf32>
    %231 = vector.extract_strided_slice %229 {offsets = [0, 32], sizes = [16, 32], strides = [1, 1]} : vector<16x96xf32> to vector<16x32xf32>
    %232 = vector.extract_strided_slice %229 {offsets = [0, 64], sizes = [16, 32], strides = [1, 1]} : vector<16x96xf32> to vector<16x32xf32>
    %233 = vector.extract_strided_slice %230 {offsets = [0, 0], sizes = [16, 8], strides = [1, 1]} : vector<16x32xf32> to vector<16x8xf32>
    %234 = arith.truncf %233 : vector<16x8xf32> to vector<16x8xbf16>
    %235 = vector.extract_strided_slice %231 {offsets = [0, 0], sizes = [16, 8], strides = [1, 1]} : vector<16x32xf32> to vector<16x8xf32>
    %236 = arith.truncf %235 : vector<16x8xf32> to vector<16x8xbf16>
    %237 = vector.extract_strided_slice %232 {offsets = [0, 0], sizes = [16, 8], strides = [1, 1]} : vector<16x32xf32> to vector<16x8xf32>
    %238 = arith.truncf %237 : vector<16x8xf32> to vector<16x8xbf16>
    %cst_77 = arith.constant dense<0.000000e+00> : vector<16x16xf32>
    %239 = tpu.matmul %234, %236, %cst_77 {dimension_numbers = #tpu.dot_dimension_numbers<[1], [1], [0], [0], [0, 0, 1, 0], [], []>} : vector<16x8xbf16>, vector<16x8xbf16>, vector<16x16xf32> -> vector<16x16xf32>
    %cst_78 = arith.constant 0.353553385 : f32
    %240 = vector.broadcast %cst_78 : f32 to vector<16x16xf32>
    %241 = arith.mulf %239, %240 : vector<16x16xf32>
    %242 = arith.addf %241, %26 : vector<16x16xf32>
    %cst_79 = arith.constant dense<0xFF800000> : vector<16xf32>
    %243 = vector.multi_reduction <maximumf>, %242, %cst_79 [1] : vector<16x16xf32> to vector<16xf32>
    %244 = vector.shape_cast %243 : vector<16xf32> to vector<16x1xf32>
    %245 = vector.broadcast %244 : vector<16x1xf32> to vector<16x16xf32>
    %246 = arith.subf %242, %245 : vector<16x16xf32>
    %247 = math.exp %246 : vector<16x16xf32>
    %cst_80 = arith.constant dense<0.000000e+00> : vector<16xf32>
    %248 = vector.multi_reduction <add>, %247, %cst_80 [1] : vector<16x16xf32> to vector<16xf32>
    %249 = vector.shape_cast %248 : vector<16xf32> to vector<16x1xf32>
    %250 = tpu.reciprocal %249 {approx = true} : vector<16x1xf32> -> vector<16x1xf32>
    %251 = vector.broadcast %250 : vector<16x1xf32> to vector<16x16xf32>
    %252 = arith.mulf %247, %251 : vector<16x16xf32>
    %253 = arith.truncf %252 : vector<16x16xf32> to vector<16x16xbf16>
    %cst_81 = arith.constant dense<0.000000e+00> : vector<16x8xf32>
    %254 = tpu.matmul %253, %238, %cst_81 {dimension_numbers = #tpu.dot_dimension_numbers<[1], [0], [0], [1], [0, 0, 1, 1], [], []>} : vector<16x16xbf16>, vector<16x8xbf16>, vector<16x8xf32> -> vector<16x8xf32>
    %255 = vector.extract_strided_slice %230 {offsets = [0, 8], sizes = [16, 8], strides = [1, 1]} : vector<16x32xf32> to vector<16x8xf32>
    %256 = arith.truncf %255 : vector<16x8xf32> to vector<16x8xbf16>
    %257 = vector.extract_strided_slice %231 {offsets = [0, 8], sizes = [16, 8], strides = [1, 1]} : vector<16x32xf32> to vector<16x8xf32>
    %258 = arith.truncf %257 : vector<16x8xf32> to vector<16x8xbf16>
    %259 = vector.extract_strided_slice %232 {offsets = [0, 8], sizes = [16, 8], strides = [1, 1]} : vector<16x32xf32> to vector<16x8xf32>
    %260 = arith.truncf %259 : vector<16x8xf32> to vector<16x8xbf16>
    %cst_82 = arith.constant dense<0.000000e+00> : vector<16x16xf32>
    %261 = tpu.matmul %256, %258, %cst_82 {dimension_numbers = #tpu.dot_dimension_numbers<[1], [1], [0], [0], [0, 0, 1, 0], [], []>} : vector<16x8xbf16>, vector<16x8xbf16>, vector<16x16xf32> -> vector<16x16xf32>
    %cst_83 = arith.constant 0.353553385 : f32
    %262 = vector.broadcast %cst_83 : f32 to vector<16x16xf32>
    %263 = arith.mulf %261, %262 : vector<16x16xf32>
    %264 = arith.addf %263, %26 : vector<16x16xf32>
    %cst_84 = arith.constant dense<0xFF800000> : vector<16xf32>
    %265 = vector.multi_reduction <maximumf>, %264, %cst_84 [1] : vector<16x16xf32> to vector<16xf32>
    %266 = vector.shape_cast %265 : vector<16xf32> to vector<16x1xf32>
    %267 = vector.broadcast %266 : vector<16x1xf32> to vector<16x16xf32>
    %268 = arith.subf %264, %267 : vector<16x16xf32>
    %269 = math.exp %268 : vector<16x16xf32>
    %cst_85 = arith.constant dense<0.000000e+00> : vector<16xf32>
    %270 = vector.multi_reduction <add>, %269, %cst_85 [1] : vector<16x16xf32> to vector<16xf32>
    %271 = vector.shape_cast %270 : vector<16xf32> to vector<16x1xf32>
    %272 = tpu.reciprocal %271 {approx = true} : vector<16x1xf32> -> vector<16x1xf32>
    %273 = vector.broadcast %272 : vector<16x1xf32> to vector<16x16xf32>
    %274 = arith.mulf %269, %273 : vector<16x16xf32>
    %275 = arith.truncf %274 : vector<16x16xf32> to vector<16x16xbf16>
    %cst_86 = arith.constant dense<0.000000e+00> : vector<16x8xf32>
    %276 = tpu.matmul %275, %260, %cst_86 {dimension_numbers = #tpu.dot_dimension_numbers<[1], [0], [0], [1], [0, 0, 1, 1], [], []>} : vector<16x16xbf16>, vector<16x8xbf16>, vector<16x8xf32> -> vector<16x8xf32>
    %277 = vector.extract_strided_slice %230 {offsets = [0, 16], sizes = [16, 8], strides = [1, 1]} : vector<16x32xf32> to vector<16x8xf32>
    %278 = arith.truncf %277 : vector<16x8xf32> to vector<16x8xbf16>
    %279 = vector.extract_strided_slice %231 {offsets = [0, 16], sizes = [16, 8], strides = [1, 1]} : vector<16x32xf32> to vector<16x8xf32>
    %280 = arith.truncf %279 : vector<16x8xf32> to vector<16x8xbf16>
    %281 = vector.extract_strided_slice %232 {offsets = [0, 16], sizes = [16, 8], strides = [1, 1]} : vector<16x32xf32> to vector<16x8xf32>
    %282 = arith.truncf %281 : vector<16x8xf32> to vector<16x8xbf16>
    %cst_87 = arith.constant dense<0.000000e+00> : vector<16x16xf32>
    %283 = tpu.matmul %278, %280, %cst_87 {dimension_numbers = #tpu.dot_dimension_numbers<[1], [1], [0], [0], [0, 0, 1, 0], [], []>} : vector<16x8xbf16>, vector<16x8xbf16>, vector<16x16xf32> -> vector<16x16xf32>
    %cst_88 = arith.constant 0.353553385 : f32
    %284 = vector.broadcast %cst_88 : f32 to vector<16x16xf32>
    %285 = arith.mulf %283, %284 : vector<16x16xf32>
    %286 = arith.addf %285, %26 : vector<16x16xf32>
    %cst_89 = arith.constant dense<0xFF800000> : vector<16xf32>
    %287 = vector.multi_reduction <maximumf>, %286, %cst_89 [1] : vector<16x16xf32> to vector<16xf32>
    %288 = vector.shape_cast %287 : vector<16xf32> to vector<16x1xf32>
    %289 = vector.broadcast %288 : vector<16x1xf32> to vector<16x16xf32>
    %290 = arith.subf %286, %289 : vector<16x16xf32>
    %291 = math.exp %290 : vector<16x16xf32>
    %cst_90 = arith.constant dense<0.000000e+00> : vector<16xf32>
    %292 = vector.multi_reduction <add>, %291, %cst_90 [1] : vector<16x16xf32> to vector<16xf32>
    %293 = vector.shape_cast %292 : vector<16xf32> to vector<16x1xf32>
    %294 = tpu.reciprocal %293 {approx = true} : vector<16x1xf32> -> vector<16x1xf32>
    %295 = vector.broadcast %294 : vector<16x1xf32> to vector<16x16xf32>
    %296 = arith.mulf %291, %295 : vector<16x16xf32>
    %297 = arith.truncf %296 : vector<16x16xf32> to vector<16x16xbf16>
    %cst_91 = arith.constant dense<0.000000e+00> : vector<16x8xf32>
    %298 = tpu.matmul %297, %282, %cst_91 {dimension_numbers = #tpu.dot_dimension_numbers<[1], [0], [0], [1], [0, 0, 1, 1], [], []>} : vector<16x16xbf16>, vector<16x8xbf16>, vector<16x8xf32> -> vector<16x8xf32>
    %299 = vector.extract_strided_slice %230 {offsets = [0, 24], sizes = [16, 8], strides = [1, 1]} : vector<16x32xf32> to vector<16x8xf32>
    %300 = arith.truncf %299 : vector<16x8xf32> to vector<16x8xbf16>
    %301 = vector.extract_strided_slice %231 {offsets = [0, 24], sizes = [16, 8], strides = [1, 1]} : vector<16x32xf32> to vector<16x8xf32>
    %302 = arith.truncf %301 : vector<16x8xf32> to vector<16x8xbf16>
    %303 = vector.extract_strided_slice %232 {offsets = [0, 24], sizes = [16, 8], strides = [1, 1]} : vector<16x32xf32> to vector<16x8xf32>
    %304 = arith.truncf %303 : vector<16x8xf32> to vector<16x8xbf16>
    %cst_92 = arith.constant dense<0.000000e+00> : vector<16x16xf32>
    %305 = tpu.matmul %300, %302, %cst_92 {dimension_numbers = #tpu.dot_dimension_numbers<[1], [1], [0], [0], [0, 0, 1, 0], [], []>} : vector<16x8xbf16>, vector<16x8xbf16>, vector<16x16xf32> -> vector<16x16xf32>
    %cst_93 = arith.constant 0.353553385 : f32
    %306 = vector.broadcast %cst_93 : f32 to vector<16x16xf32>
    %307 = arith.mulf %305, %306 : vector<16x16xf32>
    %308 = arith.addf %307, %26 : vector<16x16xf32>
    %cst_94 = arith.constant dense<0xFF800000> : vector<16xf32>
    %309 = vector.multi_reduction <maximumf>, %308, %cst_94 [1] : vector<16x16xf32> to vector<16xf32>
    %310 = vector.shape_cast %309 : vector<16xf32> to vector<16x1xf32>
    %311 = vector.broadcast %310 : vector<16x1xf32> to vector<16x16xf32>
    %312 = arith.subf %308, %311 : vector<16x16xf32>
    %313 = math.exp %312 : vector<16x16xf32>
    %cst_95 = arith.constant dense<0.000000e+00> : vector<16xf32>
    %314 = vector.multi_reduction <add>, %313, %cst_95 [1] : vector<16x16xf32> to vector<16xf32>
    %315 = vector.shape_cast %314 : vector<16xf32> to vector<16x1xf32>
    %316 = tpu.reciprocal %315 {approx = true} : vector<16x1xf32> -> vector<16x1xf32>
    %317 = vector.broadcast %316 : vector<16x1xf32> to vector<16x16xf32>
    %318 = arith.mulf %313, %317 : vector<16x16xf32>
    %319 = arith.truncf %318 : vector<16x16xf32> to vector<16x16xbf16>
    %cst_96 = arith.constant dense<0.000000e+00> : vector<16x8xf32>
    %320 = tpu.matmul %319, %304, %cst_96 {dimension_numbers = #tpu.dot_dimension_numbers<[1], [0], [0], [1], [0, 0, 1, 1], [], []>} : vector<16x16xbf16>, vector<16x8xbf16>, vector<16x8xf32> -> vector<16x8xf32>
    %321 = tpu.concatenate %254, %276, %298, %320 in 1 : vector<16x8xf32>, vector<16x8xf32>, vector<16x8xf32>, vector<16x8xf32> -> vector<16x32xf32>
    %322 = arith.truncf %321 : vector<16x32xf32> to vector<16x32xbf16>
    %c1_97 = arith.constant 1 : index
    %c0_98 = arith.constant 0 : index
    %c0_99 = arith.constant 0 : index
    %323 = vector.load %arg5[%c1_97, %c0_98, %c0_99] : memref<2x32x32xbf16, #tpu.memory_space<vmem>>, vector<1x32x32xbf16>
    %324 = vector.shape_cast %323 : vector<1x32x32xbf16> to vector<32x32xbf16>
    %cst_100 = arith.constant dense<0.000000e+00> : vector<16x32xf32>
    %325 = tpu.matmul %322, %324, %cst_100 {dimension_numbers = #tpu.dot_dimension_numbers<[1], [0], [0], [1], [0, 0, 1, 1], [], []>} : vector<16x32xbf16>, vector<32x32xbf16>, vector<16x32xf32> -> vector<16x32xf32>
    %326 = vector.broadcast %216 : vector<1x32xf32> to vector<16x32xf32>
    %327 = arith.addf %325, %326 : vector<16x32xf32>
    %328 = arith.addf %213, %327 : vector<16x32xf32>
    %cst_101 = arith.constant dense<0.000000e+00> : vector<16xf32>
    %329 = vector.multi_reduction <add>, %328, %cst_101 [1] : vector<16x32xf32> to vector<16xf32>
    %330 = vector.shape_cast %329 : vector<16xf32> to vector<16x1xf32>
    %cst_102 = arith.constant 3.200000e+01 : f32
    %331 = vector.broadcast %cst_102 : f32 to vector<16x1xf32>
    %332 = arith.divf %330, %331 : vector<16x1xf32>
    %333 = vector.broadcast %332 : vector<16x1xf32> to vector<16x32xf32>
    %334 = arith.subf %328, %333 : vector<16x32xf32>
    %335 = arith.mulf %334, %334 : vector<16x32xf32>
    %cst_103 = arith.constant dense<0.000000e+00> : vector<16xf32>
    %336 = vector.multi_reduction <add>, %335, %cst_103 [1] : vector<16x32xf32> to vector<16xf32>
    %337 = vector.shape_cast %336 : vector<16xf32> to vector<16x1xf32>
    %cst_104 = arith.constant 3.200000e+01 : f32
    %338 = vector.broadcast %cst_104 : f32 to vector<16x1xf32>
    %339 = arith.divf %337, %338 : vector<16x1xf32>
    %340 = vector.broadcast %332 : vector<16x1xf32> to vector<16x32xf32>
    %341 = arith.subf %328, %340 : vector<16x32xf32>
    %cst_105 = arith.constant 9.99999996E-13 : f32
    %342 = vector.broadcast %cst_105 : f32 to vector<16x1xf32>
    %343 = arith.addf %339, %342 : vector<16x1xf32>
    %344 = math.rsqrt %343 : vector<16x1xf32>
    %345 = vector.broadcast %344 : vector<16x1xf32> to vector<16x32xf32>
    %346 = arith.mulf %341, %345 : vector<16x32xf32>
    %347 = vector.broadcast %217 : vector<1x32xf32> to vector<16x32xf32>
    %348 = arith.mulf %346, %347 : vector<16x32xf32>
    %349 = vector.broadcast %218 : vector<1x32xf32> to vector<16x32xf32>
    %350 = arith.addf %348, %349 : vector<16x32xf32>
    %351 = arith.truncf %350 : vector<16x32xf32> to vector<16x32xbf16>
    %c1_106 = arith.constant 1 : index
    %c0_107 = arith.constant 0 : index
    %c0_108 = arith.constant 0 : index
    %352 = vector.load %arg6[%c1_106, %c0_107, %c0_108] : memref<2x32x64xbf16, #tpu.memory_space<vmem>>, vector<1x32x64xbf16>
    %353 = vector.shape_cast %352 : vector<1x32x64xbf16> to vector<32x64xbf16>
    %cst_109 = arith.constant dense<0.000000e+00> : vector<16x64xf32>
    %354 = tpu.matmul %351, %353, %cst_109 {dimension_numbers = #tpu.dot_dimension_numbers<[1], [0], [0], [1], [0, 0, 1, 1], [], []>} : vector<16x32xbf16>, vector<32x64xbf16>, vector<16x64xf32> -> vector<16x64xf32>
    %c1_110 = arith.constant 1 : index
    %c0_111 = arith.constant 0 : index
    %c0_112 = arith.constant 0 : index
    %355 = vector.load %arg7[%c1_110, %c0_111, %c0_112] : memref<2x1x64xf32, #tpu.memory_space<vmem>>, vector<1x1x64xf32>
    %356 = vector.shape_cast %355 : vector<1x1x64xf32> to vector<1x64xf32>
    %357 = vector.broadcast %356 : vector<1x64xf32> to vector<16x64xf32>
    %358 = arith.addf %354, %357 : vector<16x64xf32>
    %359 = arith.mulf %358, %358 : vector<16x64xf32>
    %360 = arith.mulf %358, %359 : vector<16x64xf32>
    %cst_113 = arith.constant 4.471500e-02 : f32
    %361 = vector.broadcast %cst_113 : f32 to vector<16x64xf32>
    %362 = arith.mulf %361, %360 : vector<16x64xf32>
    %363 = arith.addf %358, %362 : vector<16x64xf32>
    %cst_114 = arith.constant 0.797884583 : f32
    %364 = vector.broadcast %cst_114 : f32 to vector<16x64xf32>
    %365 = arith.mulf %364, %363 : vector<16x64xf32>
    %366 = math.tanh %365 : vector<16x64xf32>
    %cst_115 = arith.constant 1.000000e+00 : f32
    %367 = vector.broadcast %cst_115 : f32 to vector<16x64xf32>
    %368 = arith.addf %367, %366 : vector<16x64xf32>
    %cst_116 = arith.constant 5.000000e-01 : f32
    %369 = vector.broadcast %cst_116 : f32 to vector<16x64xf32>
    %370 = arith.mulf %369, %368 : vector<16x64xf32>
    %371 = arith.mulf %358, %370 : vector<16x64xf32>
    %372 = arith.truncf %371 : vector<16x64xf32> to vector<16x64xbf16>
    %c1_117 = arith.constant 1 : index
    %c0_118 = arith.constant 0 : index
    %c0_119 = arith.constant 0 : index
    %373 = vector.load %arg8[%c1_117, %c0_118, %c0_119] : memref<2x64x32xbf16, #tpu.memory_space<vmem>>, vector<1x64x32xbf16>
    %374 = vector.shape_cast %373 : vector<1x64x32xbf16> to vector<64x32xbf16>
    %cst_120 = arith.constant dense<0.000000e+00> : vector<16x32xf32>
    %375 = tpu.matmul %372, %374, %cst_120 {dimension_numbers = #tpu.dot_dimension_numbers<[1], [0], [0], [1], [0, 0, 1, 1], [], []>} : vector<16x64xbf16>, vector<64x32xbf16>, vector<16x32xf32> -> vector<16x32xf32>
    %376 = vector.broadcast %219 : vector<1x32xf32> to vector<16x32xf32>
    %377 = arith.addf %375, %376 : vector<16x32xf32>
    %378 = arith.addf %350, %377 : vector<16x32xf32>
    %cst_121 = arith.constant dense<0.000000e+00> : vector<16xf32>
    %379 = vector.multi_reduction <add>, %378, %cst_121 [1] : vector<16x32xf32> to vector<16xf32>
    %380 = vector.shape_cast %379 : vector<16xf32> to vector<16x1xf32>
    %cst_122 = arith.constant 3.200000e+01 : f32
    %381 = vector.broadcast %cst_122 : f32 to vector<16x1xf32>
    %382 = arith.divf %380, %381 : vector<16x1xf32>
    %383 = vector.broadcast %382 : vector<16x1xf32> to vector<16x32xf32>
    %384 = arith.subf %378, %383 : vector<16x32xf32>
    %385 = arith.mulf %384, %384 : vector<16x32xf32>
    %cst_123 = arith.constant dense<0.000000e+00> : vector<16xf32>
    %386 = vector.multi_reduction <add>, %385, %cst_123 [1] : vector<16x32xf32> to vector<16xf32>
    %387 = vector.shape_cast %386 : vector<16xf32> to vector<16x1xf32>
    %cst_124 = arith.constant 3.200000e+01 : f32
    %388 = vector.broadcast %cst_124 : f32 to vector<16x1xf32>
    %389 = arith.divf %387, %388 : vector<16x1xf32>
    %390 = vector.broadcast %382 : vector<16x1xf32> to vector<16x32xf32>
    %391 = arith.subf %378, %390 : vector<16x32xf32>
    %cst_125 = arith.constant 9.99999996E-13 : f32
    %392 = vector.broadcast %cst_125 : f32 to vector<16x1xf32>
    %393 = arith.addf %389, %392 : vector<16x1xf32>
    %394 = math.rsqrt %393 : vector<16x1xf32>
    %395 = vector.broadcast %394 : vector<16x1xf32> to vector<16x32xf32>
    %396 = arith.mulf %391, %395 : vector<16x32xf32>
    %397 = vector.broadcast %220 : vector<1x32xf32> to vector<16x32xf32>
    %398 = arith.mulf %396, %397 : vector<16x32xf32>
    %399 = vector.broadcast %221 : vector<1x32xf32> to vector<16x32xf32>
    %400 = arith.addf %398, %399 : vector<16x32xf32>
    %c0_126 = arith.constant 0 : index
    %c0_127 = arith.constant 0 : index
    %401 = vector.load %arg12[%c0_126, %c0_127] : memref<16x32xf32, #tpu.memory_space<vmem>>, vector<16x32xf32>
    tpu.vector_store %arg12[%c0_126, %c0_127], %400 {strides = array<i32>} : memref<16x32xf32, #tpu.memory_space<vmem>>, vector<16x32xf32>,
    %c0_128 = arith.constant 0 : index
    %c0_129 = arith.constant 0 : index
    %402 = tpu.strided_load %arg12[%c0_128, %c0_129] {strides = array<i32: 8, 1>} : memref<16x32xf32, #tpu.memory_space<vmem>>, vector<2x32xf32>
    %403 = arith.truncf %402 : vector<2x32xf32> to vector<2x32xbf16>
    %c0_130 = arith.constant 0 : index
    %c0_131 = arith.constant 0 : index
    %404 = vector.load %arg10[%c0_130, %c0_131] : memref<32x32xbf16, #tpu.memory_space<vmem>>, vector<32x32xbf16>
    %cst_132 = arith.constant dense<0.000000e+00> : vector<2x32xf32>
    %405 = tpu.matmul %403, %404, %cst_132 {dimension_numbers = #tpu.dot_dimension_numbers<[1], [0], [0], [1], [0, 0, 1, 1], [], []>} : vector<2x32xbf16>, vector<32x32xbf16>, vector<2x32xf32> -> vector<2x32xf32>
    %c0_133 = arith.constant 0 : index
    %c0_134 = arith.constant 0 : index
    %406 = vector.load %arg11[%c0_133, %c0_134] : memref<1x32xf32, #tpu.memory_space<vmem>>, vector<1x32xf32>
    %407 = vector.broadcast %406 : vector<1x32xf32> to vector<2x32xf32>
    %408 = arith.addf %405, %407 : vector<2x32xf32>
    %409 = math.tanh %408 : vector<2x32xf32>
    %410 = arith.addf %409, %402 : vector<2x32xf32>
    %c0_135 = arith.constant 0 : index
    %c0_136 = arith.constant 0 : index
    %411 = vector.load %arg13[%c0_135, %c0_136] : memref<2x32xf32, #tpu.memory_space<vmem>>, vector<2x32xf32>
    tpu.vector_store %arg13[%c0_135, %c0_136], %410 {strides = array<i32>} : memref<2x32xf32, #tpu.memory_space<vmem>>, vector<2x32xf32>,
    return
  }
}

</mosaic_0001>

<llo_original>
// kernel: bert_encoder_forward.1
$region0: #{bert_encoder_forward.1}
  #allocation0 [shape = 'u32[]', space=smem, size = 0x4, offset = 0x4, fixed_abs, tag = 'smem constant byte address 0x4 - core index']
  #allocation1 [shape = 'u32[144,128]{1,0:T(1,128)}', space=vmem, size = 0x12000, scoped, tag = 'internal scratch']
  %s0 = inlined_call_operand.vmem [shape: f32[16,16], index: 0, kind: input, shape index: {}]
  %s1 = inlined_call_operand.vmem [shape: f32[16,32], index: 1, kind: input, shape index: {}]
  %s2 = inlined_call_operand.vmem [shape: f32[2,32], index: 2, kind: input, shape index: {}]
  %s3 = inlined_call_operand.vmem [shape: bf16[2,32,96], index: 3, kind: input, shape index: {}]
  %s4 = inlined_call_operand.vmem [shape: f32[2,1,96], index: 4, kind: input, shape index: {}]
  %s5 = inlined_call_operand.vmem [shape: bf16[2,32,32], index: 5, kind: input, shape index: {}]
  %s6 = inlined_call_operand.vmem [shape: bf16[2,32,64], index: 6, kind: input, shape index: {}]
  %s7 = inlined_call_operand.vmem [shape: f32[2,1,64], index: 7, kind: input, shape index: {}]
  %s8 = inlined_call_operand.vmem [shape: bf16[2,64,32], index: 8, kind: input, shape index: {}]
  %s9 = inlined_call_operand.vmem [shape: f32[2,6,32], index: 9, kind: input, shape index: {}]
  %s10 = inlined_call_operand.vmem [shape: bf16[32,32], index: 10, kind: input, shape index: {}]
  %s11 = inlined_call_operand.vmem [shape: f32[1,32], index: 11, kind: input, shape index: {}]
  %s12 = inlined_call_operand.hbm [shape: f32[16,32], index: 12, kind: output, shape index: {0}]
  %s13 = inlined_call_operand.hbm [shape: f32[2,32], index: 13, kind: output, shape index: {1}]
  %14 = xla_tuple %s12, %s13
  %s15 = sld [smem:[#allocation0]]
  $region66: #{bert_encoder_forward.1} parent=0
    _
  %s17 = ssub.s32 1, %s15
  %s18 = scalar_select 0, %s17, %s15
  $region1: #{bert_encoder_forward.1} parent=0
    #allocation2 [shape = 'u8[8192]{0}', space=vmem, size = 0x2000, scoped, tag = 'output window, operand 0, single buffered']
    #allocation3 [shape = 's32[1]{0}', space=sflag, size = 0x4, scoped, tag = 'scoped memory for bert_encoder_forward.1']
    #allocation4 [shape = 'u8[1024]{0}', space=vmem, size = 0x400, scoped, tag = 'output window, operand 1, single buffered']
    #allocation5 [shape = 's32[1]{0}', space=sflag, size = 0x4, scoped, tag = 'scoped memory for bert_encoder_forward.1']
    %19 = vsyncpa [#allocation3], 0
    %20 = vsyncpa [#allocation5], 0
    // Predicated region
    $region2: #{bert_encoder_forward.1} parent=1 // pred_check
      _
    $region3: #{bert_encoder_forward.1} parent=1 // pred_check_branch
      %22 = sbr.rel (0) target = $region5
    $region4: #{bert_encoder_forward.1} parent=1 // pred_region
      _
    $region5: #{bert_encoder_forward.1} parent=1 // pred_fallthru
      _
    // Predicated region
    $region6: #{bert_encoder_forward.1} parent=1 // pred_check
      _
    $region7: #{bert_encoder_forward.1} parent=1 // pred_check_branch
      %24 = sbr.rel (0) target = $region9
    $region8: #{bert_encoder_forward.1} parent=1 // pred_region
      _
    $region9: #{bert_encoder_forward.1} parent=1 // pred_fallthru
      _
    // Predicated region
    $region10: #{bert_encoder_forward.1} parent=1 // pred_check
      _
    $region11: #{bert_encoder_forward.1} parent=1 // pred_check_branch
      %26 = sbr.rel (0) target = $region13
    $region12: #{bert_encoder_forward.1} parent=1 // pred_region
      _
    $region13: #{bert_encoder_forward.1} parent=1 // pred_fallthru
      _
    // Predicated region
    $region14: #{bert_encoder_forward.1} parent=1 // pred_check
      _
    $region15: #{bert_encoder_forward.1} parent=1 // pred_check_branch
      %28 = sbr.rel (0) target = $region17
    $region16: #{bert_encoder_forward.1} parent=1 // pred_region
      _
    $region17: #{bert_encoder_forward.1} parent=1 // pred_fallthru
      _
    // Predicated region
    $region18: #{bert_encoder_forward.1} parent=1 // pred_check
      _
    $region19: #{bert_encoder_forward.1} parent=1 // pred_check_branch
      %30 = sbr.rel (0) target = $region21
    $region20: #{bert_encoder_forward.1} parent=1 // pred_region
      _
    $region21: #{bert_encoder_forward.1} parent=1 // pred_fallthru
      _
    // Predicated region
    $region22: #{bert_encoder_forward.1} parent=1 // pred_check
      _
    $region23: #{bert_encoder_forward.1} parent=1 // pred_check_branch
      %32 = sbr.rel (0) target = $region25
    $region24: #{bert_encoder_forward.1} parent=1 // pred_region
      _
    $region25: #{bert_encoder_forward.1} parent=1 // pred_fallthru
      _
    // Predicated region
    $region26: #{bert_encoder_forward.1} parent=1 // pred_check
      _
    $region27: #{bert_encoder_forward.1} parent=1 // pred_check_branch
      %34 = sbr.rel (0) target = $region29
    $region28: #{bert_encoder_forward.1} parent=1 // pred_region
      _
    $region29: #{bert_encoder_forward.1} parent=1 // pred_fallthru
      _
    // Predicated region
    $region30: #{bert_encoder_forward.1} parent=1 // pred_check
      _
    $region31: #{bert_encoder_forward.1} parent=1 // pred_check_branch
      %36 = sbr.rel (0) target = $region33
    $region32: #{bert_encoder_forward.1} parent=1 // pred_region
      _
    $region33: #{bert_encoder_forward.1} parent=1 // pred_fallthru
      _
    // Predicated region
    $region34: #{bert_encoder_forward.1} parent=1 // pred_check
      _
    $region35: #{bert_encoder_forward.1} parent=1 // pred_check_branch
      %38 = sbr.rel (0) target = $region37
    $region36: #{bert_encoder_forward.1} parent=1 // pred_region
      _
    $region37: #{bert_encoder_forward.1} parent=1 // pred_fallthru
      _
    // Predicated region
    $region38: #{bert_encoder_forward.1} parent=1 // pred_check
      _
    $region39: #{bert_encoder_forward.1} parent=1 // pred_check_branch
      %40 = sbr.rel (0) target = $region41
    $region40: #{bert_encoder_forward.1} parent=1 // pred_region
      _
    $region41: #{bert_encoder_forward.1} parent=1 // pred_fallthru
      _
    // Predicated region
    $region42: #{bert_encoder_forward.1} parent=1 // pred_check
      _
    $region43: #{bert_encoder_forward.1} parent=1 // pred_check_branch
      %42 = sbr.rel (0) target = $region45
    $region44: #{bert_encoder_forward.1} parent=1 // pred_region
      _
    $region45: #{bert_encoder_forward.1} parent=1 // pred_fallthru
      _
    // Predicated region
    $region46: #{bert_encoder_forward.1} parent=1 // pred_check
      _
    $region47: #{bert_encoder_forward.1} parent=1 // pred_check_branch
      %44 = sbr.rel (0) target = $region49
    $region48: #{bert_encoder_forward.1} parent=1 // pred_region
      _
    $region49: #{bert_encoder_forward.1} parent=1 // pred_fallthru
      _
    %v46 = vld [vmem:[%s2] sm:$0x3]
    %v47 = vld [vmem:[%s1] sm:$0xff]
    %v48 = vld [vmem:[%s1 + $0x8] sm:$0xff]
    %vm49 = vcmask 261120
    %v50 = vsel %vm49, %v47, 0.0
    %51 = vadd.xlane.f32.xlu0 %v50
    %v52 = vpop.xlane.xlu0 %51
    %v53 = vsel %vm49, %v48, 0.0
    %54 = vadd.xlane.f32.xlu0 %v53
    %v55 = vpop.xlane.xlu0 %54
    %v56 = vrcp.pop 32.0
    %v57 = vmul.f32 %v52, %v56
    %v58 = vmul.f32 %v55, %v56
    %v59 = vsub.f32 %v47, %v57
    %v60 = vsub.f32 %v48, %v58
    %v61 = vmul.f32 %v59, %v59
    %v62 = vmul.f32 %v60, %v60
    %v63 = vsel %vm49, %v61, 0.0
    %64 = vadd.xlane.f32.xlu0 %v63
    %v65 = vpop.xlane.xlu0 %64
    %v66 = vsel %vm49, %v62, 0.0
    %67 = vadd.xlane.f32.xlu0 %v66
    %v68 = vpop.xlane.xlu0 %67
    %v69 = vmul.f32 %v65, %v56
    %v70 = vmul.f32 %v68, %v56
    %v71 = vadd.f32 %v69, 1e-12
    %v72 = vadd.f32 %v70, 1e-12
    %v73 = vrsqrt.pop %v71
    %v74 = vrsqrt.pop %v72
    %v75 = vmul.f32 %v59, %v73
    %v76 = vmul.f32 %v60, %v74
    %v77 = vlaneseq
    %v78 = vshrl.u32 %v77, 7
    %v79 = vsub.s32 0, %v78
    %v80 = vrot.slane %v46, %v79
    %v81 = vmul.f32 %v75, %v80
    %v82 = vmul.f32 %v76, %v80
    %v83 = vlaneseq
    %v84 = vshrl.u32 %v83, 7
    %v85 = vsub.s32 1, %v84
    %v86 = vrot.slane %v46, %v85
    %v87 = vadd.f32 %v81, %v86
    %v88 = vadd.f32 %v82, %v86
    %v89 = vld [vmem:[%s0] sm:$0xff]
    %v90 = vld [vmem:[%s0 + $0x8] sm:$0xff]
    %v91 = vld [vmem:[%s9] sm:$0x3f]
    %v92 = vpack.c.bf16 %v88, %v87
    %v93 = vld [vmem:[%s3] sm:$0xf]
    %v94 = vld [vmem:[%s3 + $0x4] sm:$0xf]
    %v95 = vld [vmem:[%s3 + $0x8] sm:$0xf]
    %v96 = vld [vmem:[%s3 + $0xc] sm:$0xf]
    %v97 = vld [vmem:[%s4] sm:$0x1]
    %v99 = vlaneseq
    %v100 = vshrl.u32 %v99, 7
    %v101 = vsub.s32 0, %v100
    %v102 = vrot.slane %v97, %v101
    %v108 = vunpack.c.l.b16 %v93
    %v109 = vunpack.c.l.b16 %v94
    %v110 = vunpack.c.l.b16 %v95
    %v111 = vunpack.c.l.b16 %v96
    %v112 = vpack.c.b16 %v109, %v108
    %v113 = vpack.c.b16 %v111, %v110
    %v117 = vsel %vm49, %v92, 0
    %119 = vmatprep.subr.bf16.mxu0 0
    %120 = vmatpush1.bf16.msra.mxu0 %v112
    %121 = vmatprep.subr.bf16.mxu0 0
    %122 = vmatpush1.bf16.msra.mxu0 %v113
    %123 = vmatprep.subr.bf16.mxu0 0
    %124 = vmatpush1.bf16.msra.mxu0 0
    %125 = vmatprep.subr.bf16.mxu0 0
    %126 = vmatpush1.bf16.msra.mxu0 0
    %127 = vmatprep.subr.bf16.mxu0 0
    %128 = vmatpush1.bf16.msra.mxu0 0
    %129 = vmatprep.subr.bf16.mxu0 0
    %130 = vmatpush1.bf16.msra.mxu0 0
    %131 = vmatprep.subr.bf16.mxu0 0
    %132 = vmatpush1.bf16.msra.mxu0 0
    %133 = vmatprep.subr.bf16.mxu0 0
    %134 = vmatpush1.bf16.msra.mxu0 0
    %135 = vmatprep.subr.bf16.mxu0 0
    %136 = vmatpush1.bf16.msra.mxu0 0
    %137 = vmatprep.subr.bf16.mxu0 0
    %138 = vmatpush1.bf16.msra.mxu0 0
    %139 = vmatprep.subr.bf16.mxu0 0
    %140 = vmatpush1.bf16.msra.mxu0 0
    %141 = vmatprep.subr.bf16.mxu0 0
    %142 = vmatpush1.bf16.msra.mxu0 0
    %143 = vmatprep.subr.bf16.mxu0 0
    %144 = vmatpush1.bf16.msra.mxu0 0
    %145 = vmatprep.subr.bf16.mxu0 0
    %146 = vmatpush1.bf16.msra.mxu0 0
    %147 = vmatprep.subr.bf16.mxu0 0
    %148 = vmatpush1.bf16.msra.mxu0 0
    %149 = vmatprep.subr.bf16.mxu0 0
    %150 = vmatpush1.bf16.msra.mxu0 0
    %151 = vmatprep.mubr.bf16.mxu0 0
    %152 = vmatmul.mubr.bf16.gmra.mrb[0].mxu0 %v117
    %v153 = vpop.f32.mrb[0].mxu0
    %v154 = vadd.f32 %v102, %v153
    %v155 = vpop.f32.mrb[0].mxu0
    %v156 = vpop.f32.mrb[0].mxu0
    %v157 = vadd.f32 %v102, %v156
    %v158 = vpop.f32.mrb[0].mxu0
    %159 = vdwg.mxu0
    %v160 = vpack.c.bf16 %v157, %v154
    %162 = vrot.lane.b32.xlu0 %v160, 96
    %v163 = vpop.permute.xlu0 %162
    %vm164 = vcmask 64512
    %v166 = vsel %vm164, %v160, 0
    %v169 = vsel %vm164, %v163, 0
    %171 = vmatprep.subr.bf16.mxu0 0
    %172 = vmatpush1.bf16.xpose.msra.mxu0 %v169
    %173 = vmatprep.subr.bf16.mxu0 0
    %174 = vmatpush1.bf16.xpose.msra.mxu0 0
    %175 = vmatprep.subr.bf16.mxu0 0
    %176 = vmatpush1.bf16.xpose.msra.mxu0 0
    %177 = vmatprep.subr.bf16.mxu0 0
    %178 = vmatpush1.bf16.xpose.msra.mxu0 0
    %179 = vmatprep.subr.bf16.mxu0 0
    %180 = vmatpush1.bf16.xpose.msra.mxu0 0
    %181 = vmatprep.subr.bf16.mxu0 0
    %182 = vmatpush1.bf16.xpose.msra.mxu0 0
    %183 = vmatprep.subr.bf16.mxu0 0
    %184 = vmatpush1.bf16.xpose.msra.mxu0 0
    %185 = vmatprep.subr.bf16.mxu0 0
    %186 = vmatpush1.bf16.xpose.msra.mxu0 0
    %187 = vmatprep.subr.bf16.mxu0 0
    %188 = vmatpush1.bf16.xpose.msra.mxu0 0
    %189 = vmatprep.subr.bf16.mxu0 0
    %190 = vmatpush1.bf16.xpose.msra.mxu0 0
    %191 = vmatprep.subr.bf16.mxu0 0
    %192 = vmatpush1.bf16.xpose.msra.mxu0 0
    %193 = vmatprep.subr.bf16.mxu0 0
    %194 = vmatpush1.bf16.xpose.msra.mxu0 0
    %195 = vmatprep.subr.bf16.mxu0 0
    %196 = vmatpush1.bf16.xpose.msra.mxu0 0
    %197 = vmatprep.subr.bf16.mxu0 0
    %198 = vmatpush1.bf16.xpose.msra.mxu0 0
    %199 = vmatprep.subr.bf16.mxu0 0
    %200 = vmatpush1.bf16.xpose.msra.mxu0 0
    %201 = vmatprep.subr.bf16.mxu0 0
    %202 = vmatpush1.bf16.xpose.msra.mxu0 0
    %203 = vmatprep.mubr.bf16.mxu0 0
    %204 = vmatmul.mubr.bf16.gmra.mrb[0].mxu0 %v166
    %v205 = vpop.f32.mrb[0].mxu0
    %v206 = vadd.f32 0.0, %v205
    %v207 = vpop.f32.mrb[0].mxu0
    %v208 = vpop.f32.mrb[0].mxu0
    %v209 = vadd.f32 0.0, %v208
    %v210 = vpop.f32.mrb[0].mxu0
    %211 = vdwg.mxu0
    %v212 = vmul.f32 %v206, 0.35355338
    %v213 = vmul.f32 %v209, 0.35355338
    %v214 = vadd.f32 %v212, %v89
    %v215 = vadd.f32 %v213, %v90
    %vm216 = vcmask 130048
    %v217 = vsel %vm216, %v214, -inf
    %218 = vmax.xlane.f32.xlu0 %v217
    %v219 = vpop.xlane.xlu0 %218
    %v220 = vsel %vm216, %v215, -inf
    %221 = vmax.xlane.f32.xlu0 %v220
    %v222 = vpop.xlane.xlu0 %221
    %v223 = vsub.f32 %v214, %v219
    %v224 = vsub.f32 %v215, %v222
    %v225 = vmul.f32 %v223, 1.442695
    %v226 = vpow.pop %v225
    %v227 = vmul.f32 %v224, 1.442695
    %v228 = vpow.pop %v227
    %v229 = vsel %vm216, %v226, 0.0
    %230 = vadd.xlane.f32.xlu0 %v229
    %v231 = vpop.xlane.xlu0 %230
    %v232 = vsel %vm216, %v228, 0.0
    %233 = vadd.xlane.f32.xlu0 %v232
    %v234 = vpop.xlane.xlu0 %233
    %v235 = vrcp.pop %v231
    %v236 = vrcp.pop %v234
    %v237 = vmul.f32 %v226, %v235
    %v238 = vmul.f32 %v228, %v236
    %v239 = vpack.c.bf16 %v238, %v237
    %240 = vrot.lane.b32.xlu0 %v160, 64
    %v241 = vpop.permute.xlu0 %240
    %v244 = vsel %vm216, %v239, 0
    %246 = vmatprep.subr.bf16.mxu0 0
    %247 = vmatpush1.bf16.msra.mxu0 %v241
    %248 = vmatprep.subr.bf16.mxu0 0
    %249 = vmatpush1.bf16.msra.mxu0 0
    %250 = vmatprep.subr.bf16.mxu0 0
    %251 = vmatpush1.bf16.msra.mxu0 0
    %252 = vmatprep.subr.bf16.mxu0 0
    %253 = vmatpush1.bf16.msra.mxu0 0
    %254 = vmatprep.subr.bf16.mxu0 0
    %255 = vmatpush1.bf16.msra.mxu0 0
    %256 = vmatprep.subr.bf16.mxu0 0
    %257 = vmatpush1.bf16.msra.mxu0 0
    %258 = vmatprep.subr.bf16.mxu0 0
    %259 = vmatpush1.bf16.msra.mxu0 0
    %260 = vmatprep.subr.bf16.mxu0 0
    %261 = vmatpush1.bf16.msra.mxu0 0
    %262 = vmatprep.subr.bf16.mxu0 0
    %263 = vmatpush1.bf16.msra.mxu0 0
    %264 = vmatprep.subr.bf16.mxu0 0
    %265 = vmatpush1.bf16.msra.mxu0 0
    %266 = vmatprep.subr.bf16.mxu0 0
    %267 = vmatpush1.bf16.msra.mxu0 0
    %268 = vmatprep.subr.bf16.mxu0 0
    %269 = vmatpush1.bf16.msra.mxu0 0
    %270 = vmatprep.subr.bf16.mxu0 0
    %271 = vmatpush1.bf16.msra.mxu0 0
    %272 = vmatprep.subr.bf16.mxu0 0
    %273 = vmatpush1.bf16.msra.mxu0 0
    %274 = vmatprep.subr.bf16.mxu0 0
    %275 = vmatpush1.bf16.msra.mxu0 0
    %276 = vmatprep.subr.bf16.mxu0 0
    %277 = vmatpush1.bf16.msra.mxu0 0
    %278 = vmatprep.mubr.bf16.mxu0 0
    %279 = vmatmul.mubr.bf16.gmra.mrb[0].mxu0 %v244
    %v280 = vpop.f32.mrb[0].mxu0
    %v281 = vadd.f32 0.0, %v280
    %v282 = vpop.f32.mrb[0].mxu0
    %v283 = vpop.f32.mrb[0].mxu0
    %v284 = vadd.f32 0.0, %v283
    %v285 = vpop.f32.mrb[0].mxu0
    %286 = vdwg.mxu0
    %287 = vrot.lane.b32.xlu0 %v160, 120
    %v288 = vpop.permute.xlu0 %287
    %289 = vrot.lane.b32.xlu0 %v160, 88
    %v290 = vpop.permute.xlu0 %289
    %v292 = vsel %vm164, %v288, 0
    %v295 = vsel %vm164, %v290, 0
    %297 = vmatprep.subr.bf16.mxu0 0
    %298 = vmatpush1.bf16.xpose.msra.mxu0 %v295
    %299 = vmatprep.subr.bf16.mxu0 0
    %300 = vmatpush1.bf16.xpose.msra.mxu0 0
    %301 = vmatprep.subr.bf16.mxu0 0
    %302 = vmatpush1.bf16.xpose.msra.mxu0 0
    %303 = vmatprep.subr.bf16.mxu0 0
    %304 = vmatpush1.bf16.xpose.msra.mxu0 0
    %305 = vmatprep.subr.bf16.mxu0 0
    %306 = vmatpush1.bf16.xpose.msra.mxu0 0
    %307 = vmatprep.subr.bf16.mxu0 0
    %308 = vmatpush1.bf16.xpose.msra.mxu0 0
    %309 = vmatprep.subr.bf16.mxu0 0
    %310 = vmatpush1.bf16.xpose.msra.mxu0 0
    %311 = vmatprep.subr.bf16.mxu0 0
    %312 = vmatpush1.bf16.xpose.msra.mxu0 0
    %313 = vmatprep.subr.bf16.mxu0 0
    %314 = vmatpush1.bf16.xpose.msra.mxu0 0
    %315 = vmatprep.subr.bf16.mxu0 0
    %316 = vmatpush1.bf16.xpose.msra.mxu0 0
    %317 = vmatprep.subr.bf16.mxu0 0
    %318 = vmatpush1.bf16.xpose.msra.mxu0 0
    %319 = vmatprep.subr.bf16.mxu0 0
    %320 = vmatpush1.bf16.xpose.msra.mxu0 0
    %321 = vmatprep.subr.bf16.mxu0 0
    %322 = vmatpush1.bf16.xpose.msra.mxu0 0
    %323 = vmatprep.subr.bf16.mxu0 0
    %324 = vmatpush1.bf16.xpose.msra.mxu0 0
    %325 = vmatprep.subr.bf16.mxu0 0
    %326 = vmatpush1.bf16.xpose.msra.mxu0 0
    %327 = vmatprep.subr.bf16.mxu0 0
    %328 = vmatpush1.bf16.xpose.msra.mxu0 0
    %329 = vmatprep.mubr.bf16.mxu0 0
    %330 = vmatmul.mubr.bf16.gmra.mrb[0].mxu0 %v292
    %v331 = vpop.f32.mrb[0].mxu0
    %v332 = vadd.f32 0.0, %v331
    %v333 = vpop.f32.mrb[0].mxu0
    %v334 = vpop.f32.mrb[0].mxu0
    %v335 = vadd.f32 0.0, %v334
    %v336 = vpop.f32.mrb[0].mxu0
    %337 = vdwg.mxu0
    %v338 = vmul.f32 %v332, 0.35355338
    %v339 = vmul.f32 %v335, 0.35355338
    %v340 = vadd.f32 %v338, %v89
    %v341 = vadd.f32 %v339, %v90
    %v342 = vsel %vm216, %v340, -inf
    %343 = vmax.xlane.f32.xlu0 %v342
    %v344 = vpop.xlane.xlu0 %343
    %v345 = vsel %vm216, %v341, -inf
    %346 = vmax.xlane.f32.xlu0 %v345
    %v347 = vpop.xlane.xlu0 %346
    %v348 = vsub.f32 %v340, %v344
    %v349 = vsub.f32 %v341, %v347
    %v350 = vmul.f32 %v348, 1.442695
    %v351 = vpow.pop %v350
    %v352 = vmul.f32 %v349, 1.442695
    %v353 = vpow.pop %v352
    %v354 = vsel %vm216, %v351, 0.0
    %355 = vadd.xlane.f32.xlu0 %v354
    %v356 = vpop.xlane.xlu0 %355
    %v357 = vsel %vm216, %v353, 0.0
    %358 = vadd.xlane.f32.xlu0 %v357
    %v359 = vpop.xlane.xlu0 %358
    %v360 = vrcp.pop %v356
    %v361 = vrcp.pop %v359
    %v362 = vmul.f32 %v351, %v360
    %v363 = vmul.f32 %v353, %v361
    %v364 = vpack.c.bf16 %v363, %v362
    %365 = vrot.lane.b32.xlu0 %v160, 56
    %v366 = vpop.permute.xlu0 %365
    %v369 = vsel %vm216, %v364, 0
    %371 = vmatprep.subr.bf16.mxu0 0
    %372 = vmatpush1.bf16.msra.mxu0 %v366
    %373 = vmatprep.subr.bf16.mxu0 0
    %374 = vmatpush1.bf16.msra.mxu0 0
    %375 = vmatprep.subr.bf16.mxu0 0
    %376 = vmatpush1.bf16.msra.mxu0 0
    %377 = vmatprep.subr.bf16.mxu0 0
    %378 = vmatpush1.bf16.msra.mxu0 0
    %379 = vmatprep.subr.bf16.mxu0 0
    %380 = vmatpush1.bf16.msra.mxu0 0
    %381 = vmatprep.subr.bf16.mxu0 0
    %382 = vmatpush1.bf16.msra.mxu0 0
    %383 = vmatprep.subr.bf16.mxu0 0
    %384 = vmatpush1.bf16.msra.mxu0 0
    %385 = vmatprep.subr.bf16.mxu0 0
    %386 = vmatpush1.bf16.msra.mxu0 0
    %387 = vmatprep.subr.bf16.mxu0 0
    %388 = vmatpush1.bf16.msra.mxu0 0
    %389 = vmatprep.subr.bf16.mxu0 0
    %390 = vmatpush1.bf16.msra.mxu0 0
    %391 = vmatprep.subr.bf16.mxu0 0
    %392 = vmatpush1.bf16.msra.mxu0 0
    %393 = vmatprep.subr.bf16.mxu0 0
    %394 = vmatpush1.bf16.msra.mxu0 0
    %395 = vmatprep.subr.bf16.mxu0 0
    %396 = vmatpush1.bf16.msra.mxu0 0
    %397 = vmatprep.subr.bf16.mxu0 0
    %398 = vmatpush1.bf16.msra.mxu0 0
    %399 = vmatprep.subr.bf16.mxu0 0
    %400 = vmatpush1.bf16.msra.mxu0 0
    %401 = vmatprep.subr.bf16.mxu0 0
    %402 = vmatpush1.bf16.msra.mxu0 0
    %403 = vmatprep.mubr.bf16.mxu0 0
    %404 = vmatmul.mubr.bf16.gmra.mrb[0].mxu0 %v369
    %v405 = vpop.f32.mrb[0].mxu0
    %v406 = vadd.f32 0.0, %v405
    %v407 = vpop.f32.mrb[0].mxu0
    %v408 = vpop.f32.mrb[0].mxu0
    %v409 = vadd.f32 0.0, %v408
    %v410 = vpop.f32.mrb[0].mxu0
    %411 = vdwg.mxu0
    %412 = vrot.lane.b32.xlu0 %v160, 112
    %v413 = vpop.permute.xlu0 %412
    %414 = vrot.lane.b32.xlu0 %v160, 80
    %v415 = vpop.permute.xlu0 %414
    %v417 = vsel %vm164, %v413, 0
    %v420 = vsel %vm164, %v415, 0
    %422 = vmatprep.subr.bf16.mxu0 0
    %423 = vmatpush1.bf16.xpose.msra.mxu0 %v420
    %424 = vmatprep.subr.bf16.mxu0 0
    %425 = vmatpush1.bf16.xpose.msra.mxu0 0
    %426 = vmatprep.subr.bf16.mxu0 0
    %427 = vmatpush1.bf16.xpose.msra.mxu0 0
    %428 = vmatprep.subr.bf16.mxu0 0
    %429 = vmatpush1.bf16.xpose.msra.mxu0 0
    %430 = vmatprep.subr.bf16.mxu0 0
    %431 = vmatpush1.bf16.xpose.msra.mxu0 0
    %432 = vmatprep.subr.bf16.mxu0 0
    %433 = vmatpush1.bf16.xpose.msra.mxu0 0
    %434 = vmatprep.subr.bf16.mxu0 0
    %435 = vmatpush1.bf16.xpose.msra.mxu0 0
    %436 = vmatprep.subr.bf16.mxu0 0
    %437 = vmatpush1.bf16.xpose.msra.mxu0 0
    %438 = vmatprep.subr.bf16.mxu0 0
    %439 = vmatpush1.bf16.xpose.msra.mxu0 0
    %440 = vmatprep.subr.bf16.mxu0 0
    %441 = vmatpush1.bf16.xpose.msra.mxu0 0
    %442 = vmatprep.subr.bf16.mxu0 0
    %443 = vmatpush1.bf16.xpose.msra.mxu0 0
    %444 = vmatprep.subr.bf16.mxu0 0
    %445 = vmatpush1.bf16.xpose.msra.mxu0 0
    %446 = vmatprep.subr.bf16.mxu0 0
    %447 = vmatpush1.bf16.xpose.msra.mxu0 0
    %448 = vmatprep.subr.bf16.mxu0 0
    %449 = vmatpush1.bf16.xpose.msra.mxu0 0
    %450 = vmatprep.subr.bf16.mxu0 0
    %451 = vmatpush1.bf16.xpose.msra.mxu0 0
    %452 = vmatprep.subr.bf16.mxu0 0
    %453 = vmatpush1.bf16.xpose.msra.mxu0 0
    %454 = vmatprep.mubr.bf16.mxu0 0
    %455 = vmatmul.mubr.bf16.gmra.mrb[0].mxu0 %v417
    %v456 = vpop.f32.mrb[0].mxu0
    %v457 = vadd.f32 0.0, %v456
    %v458 = vpop.f32.mrb[0].mxu0
    %v459 = vpop.f32.mrb[0].mxu0
    %v460 = vadd.f32 0.0, %v459
    %v461 = vpop.f32.mrb[0].mxu0
    %462 = vdwg.mxu0
    %v463 = vmul.f32 %v457, 0.35355338
    %v464 = vmul.f32 %v460, 0.35355338
    %v465 = vadd.f32 %v463, %v89
    %v466 = vadd.f32 %v464, %v90
    %v467 = vsel %vm216, %v465, -inf
    %468 = vmax.xlane.f32.xlu0 %v467
    %v469 = vpop.xlane.xlu0 %468
    %v470 = vsel %vm216, %v466, -inf
    %471 = vmax.xlane.f32.xlu0 %v470
    %v472 = vpop.xlane.xlu0 %471
    %v473 = vsub.f32 %v465, %v469
    %v474 = vsub.f32 %v466, %v472
    %v475 = vmul.f32 %v473, 1.442695
    %v476 = vpow.pop %v475
    %v477 = vmul.f32 %v474, 1.442695
    %v478 = vpow.pop %v477
    %v479 = vsel %vm216, %v476, 0.0
    %480 = vadd.xlane.f32.xlu0 %v479
    %v481 = vpop.xlane.xlu0 %480
    %v482 = vsel %vm216, %v478, 0.0
    %483 = vadd.xlane.f32.xlu0 %v482
    %v484 = vpop.xlane.xlu0 %483
    %v485 = vrcp.pop %v481
    %v486 = vrcp.pop %v484
    %v487 = vmul.f32 %v476, %v485
    %v488 = vmul.f32 %v478, %v486
    %v489 = vpack.c.bf16 %v488, %v487
    %490 = vrot.lane.b32.xlu0 %v160, 48
    %v491 = vpop.permute.xlu0 %490
    %v494 = vsel %vm216, %v489, 0
    %496 = vmatprep.subr.bf16.mxu0 0
    %497 = vmatpush1.bf16.msra.mxu0 %v491
    %498 = vmatprep.subr.bf16.mxu0 0
    %499 = vmatpush1.bf16.msra.mxu0 0
    %500 = vmatprep.subr.bf16.mxu0 0
    %501 = vmatpush1.bf16.msra.mxu0 0
    %502 = vmatprep.subr.bf16.mxu0 0
    %503 = vmatpush1.bf16.msra.mxu0 0
    %504 = vmatprep.subr.bf16.mxu0 0
    %505 = vmatpush1.bf16.msra.mxu0 0
    %506 = vmatprep.subr.bf16.mxu0 0
    %507 = vmatpush1.bf16.msra.mxu0 0
    %508 = vmatprep.subr.bf16.mxu0 0
    %509 = vmatpush1.bf16.msra.mxu0 0
    %510 = vmatprep.subr.bf16.mxu0 0
    %511 = vmatpush1.bf16.msra.mxu0 0
    %512 = vmatprep.subr.bf16.mxu0 0
    %513 = vmatpush1.bf16.msra.mxu0 0
    %514 = vmatprep.subr.bf16.mxu0 0
    %515 = vmatpush1.bf16.msra.mxu0 0
    %516 = vmatprep.subr.bf16.mxu0 0
    %517 = vmatpush1.bf16.msra.mxu0 0
    %518 = vmatprep.subr.bf16.mxu0 0
    %519 = vmatpush1.bf16.msra.mxu0 0
    %520 = vmatprep.subr.bf16.mxu0 0
    %521 = vmatpush1.bf16.msra.mxu0 0
    %522 = vmatprep.subr.bf16.mxu0 0
    %523 = vmatpush1.bf16.msra.mxu0 0
    %524 = vmatprep.subr.bf16.mxu0 0
    %525 = vmatpush1.bf16.msra.mxu0 0
    %526 = vmatprep.subr.bf16.mxu0 0
    %527 = vmatpush1.bf16.msra.mxu0 0
    %528 = vmatprep.mubr.bf16.mxu0 0
    %529 = vmatmul.mubr.bf16.gmra.mrb[0].mxu0 %v494
    %v530 = vpop.f32.mrb[0].mxu0
    %v531 = vadd.f32 0.0, %v530
    %v532 = vpop.f32.mrb[0].mxu0
    %v533 = vpop.f32.mrb[0].mxu0
    %v534 = vadd.f32 0.0, %v533
    %v535 = vpop.f32.mrb[0].mxu0
    %536 = vdwg.mxu0
    %537 = vrot.lane.b32.xlu0 %v160, 104
    %v538 = vpop.permute.xlu0 %537
    %539 = vrot.lane.b32.xlu0 %v160, 72
    %v540 = vpop.permute.xlu0 %539
    %v542 = vsel %vm164, %v538, 0
    %v545 = vsel %vm164, %v540, 0
    %547 = vmatprep.subr.bf16.mxu0 0
    %548 = vmatpush1.bf16.xpose.msra.mxu0 %v545
    %549 = vmatprep.subr.bf16.mxu0 0
    %550 = vmatpush1.bf16.xpose.msra.mxu0 0
    %551 = vmatprep.subr.bf16.mxu0 0
    %552 = vmatpush1.bf16.xpose.msra.mxu0 0
    %553 = vmatprep.subr.bf16.mxu0 0
    %554 = vmatpush1.bf16.xpose.msra.mxu0 0
    %555 = vmatprep.subr.bf16.mxu0 0
    %556 = vmatpush1.bf16.xpose.msra.mxu0 0
    %557 = vmatprep.subr.bf16.mxu0 0
    %558 = vmatpush1.bf16.xpose.msra.mxu0 0
    %559 = vmatprep.subr.bf16.mxu0 0
    %560 = vmatpush1.bf16.xpose.msra.mxu0 0
    %561 = vmatprep.subr.bf16.mxu0 0
    %562 = vmatpush1.bf16.xpose.msra.mxu0 0
    %563 = vmatprep.subr.bf16.mxu0 0
    %564 = vmatpush1.bf16.xpose.msra.mxu0 0
    %565 = vmatprep.subr.bf16.mxu0 0
    %566 = vmatpush1.bf16.xpose.msra.mxu0 0
    %567 = vmatprep.subr.bf16.mxu0 0
    %568 = vmatpush1.bf16.xpose.msra.mxu0 0
    %569 = vmatprep.subr.bf16.mxu0 0
    %570 = vmatpush1.bf16.xpose.msra.mxu0 0
    %571 = vmatprep.subr.bf16.mxu0 0
    %572 = vmatpush1.bf16.xpose.msra.mxu0 0
    %573 = vmatprep.subr.bf16.mxu0 0
    %574 = vmatpush1.bf16.xpose.msra.mxu0 0
    %575 = vmatprep.subr.bf16.mxu0 0
    %576 = vmatpush1.bf16.xpose.msra.mxu0 0
    %577 = vmatprep.subr.bf16.mxu0 0
    %578 = vmatpush1.bf16.xpose.msra.mxu0 0
    %579 = vmatprep.mubr.bf16.mxu0 0
    %580 = vmatmul.mubr.bf16.gmra.mrb[0].mxu0 %v542
    %v581 = vpop.f32.mrb[0].mxu0
    %v582 = vadd.f32 0.0, %v581
    %v583 = vpop.f32.mrb[0].mxu0
    %v584 = vpop.f32.mrb[0].mxu0
    %v585 = vadd.f32 0.0, %v584
    %v586 = vpop.f32.mrb[0].mxu0
    %587 = vdwg.mxu0
    %v588 = vmul.f32 %v582, 0.35355338
    %v589 = vmul.f32 %v585, 0.35355338
    %v590 = vadd.f32 %v588, %v89
    %v591 = vadd.f32 %v589, %v90
    %v592 = vsel %vm216, %v590, -inf
    %593 = vmax.xlane.f32.xlu0 %v592
    %v594 = vpop.xlane.xlu0 %593
    %v595 = vsel %vm216, %v591, -inf
    %596 = vmax.xlane.f32.xlu0 %v595
    %v597 = vpop.xlane.xlu0 %596
    %v598 = vsub.f32 %v590, %v594
    %v599 = vsub.f32 %v591, %v597
    %v600 = vmul.f32 %v598, 1.442695
    %v601 = vpow.pop %v600
    %v602 = vmul.f32 %v599, 1.442695
    %v603 = vpow.pop %v602
    %v604 = vsel %vm216, %v601, 0.0
    %605 = vadd.xlane.f32.xlu0 %v604
    %v606 = vpop.xlane.xlu0 %605
    %v607 = vsel %vm216, %v603, 0.0
    %608 = vadd.xlane.f32.xlu0 %v607
    %v609 = vpop.xlane.xlu0 %608
    %v610 = vrcp.pop %v606
    %v611 = vrcp.pop %v609
    %v612 = vmul.f32 %v601, %v610
    %v613 = vmul.f32 %v603, %v611
    %v614 = vpack.c.bf16 %v613, %v612
    %615 = vrot.lane.b32.xlu0 %v160, 40
    %v616 = vpop.permute.xlu0 %615
    %v619 = vsel %vm216, %v614, 0
    %621 = vmatprep.subr.bf16.mxu0 0
    %622 = vmatpush1.bf16.msra.mxu0 %v616
    %623 = vmatprep.subr.bf16.mxu0 0
    %624 = vmatpush1.bf16.msra.mxu0 0
    %625 = vmatprep.subr.bf16.mxu0 0
    %626 = vmatpush1.bf16.msra.mxu0 0
    %627 = vmatprep.subr.bf16.mxu0 0
    %628 = vmatpush1.bf16.msra.mxu0 0
    %629 = vmatprep.subr.bf16.mxu0 0
    %630 = vmatpush1.bf16.msra.mxu0 0
    %631 = vmatprep.subr.bf16.mxu0 0
    %632 = vmatpush1.bf16.msra.mxu0 0
    %633 = vmatprep.subr.bf16.mxu0 0
    %634 = vmatpush1.bf16.msra.mxu0 0
    %635 = vmatprep.subr.bf16.mxu0 0
    %636 = vmatpush1.bf16.msra.mxu0 0
    %637 = vmatprep.subr.bf16.mxu0 0
    %638 = vmatpush1.bf16.msra.mxu0 0
    %639 = vmatprep.subr.bf16.mxu0 0
    %640 = vmatpush1.bf16.msra.mxu0 0
    %641 = vmatprep.subr.bf16.mxu0 0
    %642 = vmatpush1.bf16.msra.mxu0 0
    %643 = vmatprep.subr.bf16.mxu0 0
    %644 = vmatpush1.bf16.msra.mxu0 0
    %645 = vmatprep.subr.bf16.mxu0 0
    %646 = vmatpush1.bf16.msra.mxu0 0
    %647 = vmatprep.subr.bf16.mxu0 0
    %648 = vmatpush1.bf16.msra.mxu0 0
    %649 = vmatprep.subr.bf16.mxu0 0
    %650 = vmatpush1.bf16.msra.mxu0 0
    %651 = vmatprep.subr.bf16.mxu0 0
    %652 = vmatpush1.bf16.msra.mxu0 0
    %653 = vmatprep.mubr.bf16.mxu0 0
    %654 = vmatmul.mubr.bf16.gmra.mrb[0].mxu0 %v619
    %v655 = vpop.f32.mrb[0].mxu0
    %v656 = vadd.f32 0.0, %v655
    %v657 = vpop.f32.mrb[0].mxu0
    %v658 = vpop.f32.mrb[0].mxu0
    %v659 = vadd.f32 0.0, %v658
    %v660 = vpop.f32.mrb[0].mxu0
    %661 = vdwg.mxu0
    %664 = vrot.lane.b32.xlu0 %v406, 8
    %v665 = vpop.permute.xlu0 %664
    %666 = vrot.lane.b32.xlu0 %v409, 8
    %v667 = vpop.permute.xlu0 %666
    %672 = vrot.lane.b32.xlu0 %v531, 16
    %v673 = vpop.permute.xlu0 %672
    %674 = vrot.lane.b32.xlu0 %v534, 16
    %v675 = vpop.permute.xlu0 %674
    %680 = vrot.lane.b32.xlu0 %v656, 24
    %v681 = vpop.permute.xlu0 %680
    %682 = vrot.lane.b32.xlu0 %v659, 24
    %v683 = vpop.permute.xlu0 %682
    %v686 = vsel %vm164, %v281, %v665
    %v687 = vsel %vm164, %v284, %v667
    %v688 = vsel %vm216, %v686, %v673
    %v689 = vsel %vm216, %v687, %v675
    %vm690 = vcmask 195584
    %v691 = vsel %vm690, %v688, %v681
    %v692 = vsel %vm690, %v689, %v683
    %v693 = vpack.c.bf16 %v692, %v691
    %v694 = vld [vmem:[%s5] sm:$0xf]
    %v695 = vld [vmem:[%s5 + $0x4] sm:$0xf]
    %v696 = vld [vmem:[%s5 + $0x8] sm:$0xf]
    %v697 = vld [vmem:[%s5 + $0xc] sm:$0xf]
    %v698 = vlaneseq
    %v699 = vshrl.u32 %v698, 7
    %v700 = vsub.s32 0, %v699
    %v701 = vrot.slane %v91, %v700
    %v706 = vunpack.c.l.b16 %v694
    %v707 = vunpack.c.l.b16 %v695
    %v708 = vunpack.c.l.b16 %v696
    %v709 = vunpack.c.l.b16 %v697
    %v710 = vpack.c.b16 %v707, %v706
    %v711 = vpack.c.b16 %v709, %v708
    %v715 = vsel %vm49, %v693, 0
    %717 = vmatprep.subr.bf16.mxu0 0
    %718 = vmatpush1.bf16.msra.mxu0 %v710
    %719 = vmatprep.subr.bf16.mxu0 0
    %720 = vmatpush1.bf16.msra.mxu0 %v711
    %721 = vmatprep.subr.bf16.mxu0 0
    %722 = vmatpush1.bf16.msra.mxu0 0
    %723 = vmatprep.subr.bf16.mxu0 0
    %724 = vmatpush1.bf16.msra.mxu0 0
    %725 = vmatprep.subr.bf16.mxu0 0
    %726 = vmatpush1.bf16.msra.mxu0 0
    %727 = vmatprep.subr.bf16.mxu0 0
    %728 = vmatpush1.bf16.msra.mxu0 0
    %729 = vmatprep.subr.bf16.mxu0 0
    %730 = vmatpush1.bf16.msra.mxu0 0
    %731 = vmatprep.subr.bf16.mxu0 0
    %732 = vmatpush1.bf16.msra.mxu0 0
    %733 = vmatprep.subr.bf16.mxu0 0
    %734 = vmatpush1.bf16.msra.mxu0 0
    %735 = vmatprep.subr.bf16.mxu0 0
    %736 = vmatpush1.bf16.msra.mxu0 0
    %737 = vmatprep.subr.bf16.mxu0 0
    %738 = vmatpush1.bf16.msra.mxu0 0
    %739 = vmatprep.subr.bf16.mxu0 0
    %740 = vmatpush1.bf16.msra.mxu0 0
    %741 = vmatprep.subr.bf16.mxu0 0
    %742 = vmatpush1.bf16.msra.mxu0 0
    %743 = vmatprep.subr.bf16.mxu0 0
    %744 = vmatpush1.bf16.msra.mxu0 0
    %745 = vmatprep.subr.bf16.mxu0 0
    %746 = vmatpush1.bf16.msra.mxu0 0
    %747 = vmatprep.subr.bf16.mxu0 0
    %748 = vmatpush1.bf16.msra.mxu0 0
    %749 = vmatprep.mubr.bf16.mxu0 0
    %750 = vmatmul.mubr.bf16.gmra.mrb[0].mxu0 %v715
    %v751 = vpop.f32.mrb[0].mxu0
    %v752 = vadd.f32 %v701, %v751
    %v753 = vpop.f32.mrb[0].mxu0
    %v754 = vpop.f32.mrb[0].mxu0
    %v755 = vadd.f32 %v701, %v754
    %v756 = vpop.f32.mrb[0].mxu0
    %757 = vdwg.mxu0
    %v758 = vadd.f32 %v87, %v752
    %v759 = vadd.f32 %v88, %v755
    %v760 = vsel %vm49, %v758, 0.0
    %761 = vadd.xlane.f32.xlu0 %v760
    %v762 = vpop.xlane.xlu0 %761
    %v763 = vsel %vm49, %v759, 0.0
    %764 = vadd.xlane.f32.xlu0 %v763
    %v765 = vpop.xlane.xlu0 %764
    %v766 = vmul.f32 %v762, %v56
    %v767 = vmul.f32 %v765, %v56
    %v768 = vsub.f32 %v758, %v766
    %v769 = vsub.f32 %v759, %v767
    %v770 = vmul.f32 %v768, %v768
    %v771 = vmul.f32 %v769, %v769
    %v772 = vsel %vm49, %v770, 0.0
    %773 = vadd.xlane.f32.xlu0 %v772
    %v774 = vpop.xlane.xlu0 %773
    %v775 = vsel %vm49, %v771, 0.0
    %776 = vadd.xlane.f32.xlu0 %v775
    %v777 = vpop.xlane.xlu0 %776
    %v778 = vmul.f32 %v774, %v56
    %v779 = vmul.f32 %v777, %v56
    %v780 = vadd.f32 %v778, 1e-12
    %v781 = vadd.f32 %v779, 1e-12
    %v782 = vrsqrt.pop %v780
    %v783 = vrsqrt.pop %v781
    %v784 = vmul.f32 %v768, %v782
    %v785 = vmul.f32 %v769, %v783
    %v786 = vlaneseq
    %v787 = vshrl.u32 %v786, 7
    %v788 = vsub.s32 1, %v787
    %v789 = vrot.slane %v91, %v788
    %v790 = vmul.f32 %v784, %v789
    %v791 = vmul.f32 %v785, %v789
    %v792 = vlaneseq
    %v793 = vshrl.u32 %v792, 7
    %v794 = vsub.s32 2, %v793
    %v795 = vrot.slane %v91, %v794
    %v796 = vadd.f32 %v790, %v795
    %v797 = vadd.f32 %v791, %v795
    %v798 = vpack.c.bf16 %v797, %v796
    %v799 = vld [vmem:[%s6] sm:$0xf]
    %v800 = vld [vmem:[%s6 + $0x4] sm:$0xf]
    %v801 = vld [vmem:[%s6 + $0x8] sm:$0xf]
    %v802 = vld [vmem:[%s6 + $0xc] sm:$0xf]
    %v803 = vld [vmem:[%s7] sm:$0x1]
    %v805 = vlaneseq
    %v806 = vshrl.u32 %v805, 7
    %v807 = vsub.s32 0, %v806
    %v808 = vrot.slane %v803, %v807
    %v814 = vunpack.c.l.b16 %v799
    %v815 = vunpack.c.l.b16 %v800
    %v816 = vunpack.c.l.b16 %v801
    %v817 = vunpack.c.l.b16 %v802
    %v818 = vpack.c.b16 %v815, %v814
    %v819 = vpack.c.b16 %v817, %v816
    %v823 = vsel %vm49, %v798, 0
    %825 = vmatprep.subr.bf16.mxu0 0
    %826 = vmatpush1.bf16.msra.mxu0 %v818
    %827 = vmatprep.subr.bf16.mxu0 0
    %828 = vmatpush1.bf16.msra.mxu0 %v819
    %829 = vmatprep.subr.bf16.mxu0 0
    %830 = vmatpush1.bf16.msra.mxu0 0
    %831 = vmatprep.subr.bf16.mxu0 0
    %832 = vmatpush1.bf16.msra.mxu0 0
    %833 = vmatprep.subr.bf16.mxu0 0
    %834 = vmatpush1.bf16.msra.mxu0 0
    %835 = vmatprep.subr.bf16.mxu0 0
    %836 = vmatpush1.bf16.msra.mxu0 0
    %837 = vmatprep.subr.bf16.mxu0 0
    %838 = vmatpush1.bf16.msra.mxu0 0
    %839 = vmatprep.subr.bf16.mxu0 0
    %840 = vmatpush1.bf16.msra.mxu0 0
    %841 = vmatprep.subr.bf16.mxu0 0
    %842 = vmatpush1.bf16.msra.mxu0 0
    %843 = vmatprep.subr.bf16.mxu0 0
    %844 = vmatpush1.bf16.msra.mxu0 0
    %845 = vmatprep.subr.bf16.mxu0 0
    %846 = vmatpush1.bf16.msra.mxu0 0
    %847 = vmatprep.subr.bf16.mxu0 0
    %848 = vmatpush1.bf16.msra.mxu0 0
    %849 = vmatprep.subr.bf16.mxu0 0
    %850 = vmatpush1.bf16.msra.mxu0 0
    %851 = vmatprep.subr.bf16.mxu0 0
    %852 = vmatpush1.bf16.msra.mxu0 0
    %853 = vmatprep.subr.bf16.mxu0 0
    %854 = vmatpush1.bf16.msra.mxu0 0
    %855 = vmatprep.subr.bf16.mxu0 0
    %856 = vmatpush1.bf16.msra.mxu0 0
    %857 = vmatprep.mubr.bf16.mxu0 0
    %858 = vmatmul.mubr.bf16.gmra.mrb[0].mxu0 %v823
    %v859 = vpop.f32.mrb[0].mxu0
    %v860 = vadd.f32 %v808, %v859
    %v861 = vpop.f32.mrb[0].mxu0
    %v862 = vpop.f32.mrb[0].mxu0
    %v863 = vadd.f32 %v808, %v862
    %v864 = vpop.f32.mrb[0].mxu0
    %865 = vdwg.mxu0
    %v866 = vmul.f32 %v860, %v860
    %v867 = vmul.f32 %v863, %v863
    %v868 = vmul.f32 %v860, %v866
    %v869 = vmul.f32 %v863, %v867
    %v870 = vmul.f32 %v868, 0.044715
    %v871 = vmul.f32 %v869, 0.044715
    %v872 = vadd.f32 %v860, %v870
    %v873 = vadd.f32 %v863, %v871
    %v874 = vmul.f32 %v872, 0.7978846
    %v875 = vmul.f32 %v873, 0.7978846
    %v876 = vtanh.pop %v874
    %v877 = vtanh.pop %v875
    %v878 = vadd.f32 %v876, 1.0
    %v879 = vadd.f32 %v877, 1.0
    %v880 = vmul.f32 %v878, 0.5
    %v881 = vmul.f32 %v879, 0.5
    %v882 = vmul.f32 %v860, %v880
    %v883 = vmul.f32 %v863, %v881
    %v884 = vpack.c.bf16 %v883, %v882
    %v885 = vld [vmem:[%s8] sm:$0xf]
    %v886 = vld [vmem:[%s8 + $0x4] sm:$0xf]
    %v887 = vld [vmem:[%s8 + $0x8] sm:$0xf]
    %v888 = vld [vmem:[%s8 + $0xc] sm:$0xf]
    %v889 = vld [vmem:[%s8 + $0x10] sm:$0xf]
    %v890 = vld [vmem:[%s8 + $0x14] sm:$0xf]
    %v891 = vld [vmem:[%s8 + $0x18] sm:$0xf]
    %v892 = vld [vmem:[%s8 + $0x1c] sm:$0xf]
    %v893 = vlaneseq
    %v894 = vshrl.u32 %v893, 7
    %v895 = vsub.s32 3, %v894
    %v896 = vrot.slane %v91, %v895
    %v905 = vunpack.c.l.b16 %v885
    %v906 = vunpack.c.l.b16 %v886
    %v907 = vunpack.c.l.b16 %v887
    %v908 = vunpack.c.l.b16 %v888
    %v909 = vunpack.c.l.b16 %v889
    %v910 = vunpack.c.l.b16 %v890
    %v911 = vunpack.c.l.b16 %v891
    %v912 = vunpack.c.l.b16 %v892
    %v913 = vpack.c.b16 %v906, %v905
    %v914 = vpack.c.b16 %v908, %v907
    %v915 = vpack.c.b16 %v910, %v909
    %v916 = vpack.c.b16 %v912, %v911
    %vm921 = vcmask 523264
    %v923 = vsel %vm921, %v884, 0
    %925 = vmatprep.subr.bf16.mxu0 0
    %926 = vmatpush1.bf16.msra.mxu0 %v913
    %927 = vmatprep.subr.bf16.mxu0 0
    %928 = vmatpush1.bf16.msra.mxu0 %v914
    %929 = vmatprep.subr.bf16.mxu0 0
    %930 = vmatpush1.bf16.msra.mxu0 %v915
    %931 = vmatprep.subr.bf16.mxu0 0
    %932 = vmatpush1.bf16.msra.mxu0 %v916
    %933 = vmatprep.subr.bf16.mxu0 0
    %934 = vmatpush1.bf16.msra.mxu0 0
    %935 = vmatprep.subr.bf16.mxu0 0
    %936 = vmatpush1.bf16.msra.mxu0 0
    %937 = vmatprep.subr.bf16.mxu0 0
    %938 = vmatpush1.bf16.msra.mxu0 0
    %939 = vmatprep.subr.bf16.mxu0 0
    %940 = vmatpush1.bf16.msra.mxu0 0
    %941 = vmatprep.subr.bf16.mxu0 0
    %942 = vmatpush1.bf16.msra.mxu0 0
    %943 = vmatprep.subr.bf16.mxu0 0
    %944 = vmatpush1.bf16.msra.mxu0 0
    %945 = vmatprep.subr.bf16.mxu0 0
    %946 = vmatpush1.bf16.msra.mxu0 0
    %947 = vmatprep.subr.bf16.mxu0 0
    %948 = vmatpush1.bf16.msra.mxu0 0
    %949 = vmatprep.subr.bf16.mxu0 0
    %950 = vmatpush1.bf16.msra.mxu0 0
    %951 = vmatprep.subr.bf16.mxu0 0
    %952 = vmatpush1.bf16.msra.mxu0 0
    %953 = vmatprep.subr.bf16.mxu0 0
    %954 = vmatpush1.bf16.msra.mxu0 0
    %955 = vmatprep.subr.bf16.mxu0 0
    %956 = vmatpush1.bf16.msra.mxu0 0
    %957 = vmatprep.mubr.bf16.mxu0 0
    %958 = vmatmul.mubr.bf16.gmra.mrb[0].mxu0 %v923
    %v959 = vpop.f32.mrb[0].mxu0
    %v960 = vadd.f32 %v896, %v959
    %v961 = vpop.f32.mrb[0].mxu0
    %v962 = vpop.f32.mrb[0].mxu0
    %v963 = vadd.f32 %v896, %v962
    %v964 = vpop.f32.mrb[0].mxu0
    %965 = vdwg.mxu0
    %v966 = vadd.f32 %v796, %v960
    %v967 = vadd.f32 %v797, %v963
    %v968 = vsel %vm49, %v966, 0.0
    %969 = vadd.xlane.f32.xlu0 %v968
    %v970 = vpop.xlane.xlu0 %969
    %v971 = vsel %vm49, %v967, 0.0
    %972 = vadd.xlane.f32.xlu0 %v971
    %v973 = vpop.xlane.xlu0 %972
    %v974 = vmul.f32 %v970, %v56
    %v975 = vmul.f32 %v973, %v56
    %v976 = vsub.f32 %v966, %v974
    %v977 = vsub.f32 %v967, %v975
    %v978 = vmul.f32 %v976, %v976
    %v979 = vmul.f32 %v977, %v977
    %v980 = vsel %vm49, %v978, 0.0
    %981 = vadd.xlane.f32.xlu0 %v980
    %v982 = vpop.xlane.xlu0 %981
    %v983 = vsel %vm49, %v979, 0.0
    %984 = vadd.xlane.f32.xlu0 %v983
    %v985 = vpop.xlane.xlu0 %984
    %v986 = vmul.f32 %v982, %v56
    %v987 = vmul.f32 %v985, %v56
    %v988 = vadd.f32 %v986, 1e-12
    %v989 = vadd.f32 %v987, 1e-12
    %v990 = vrsqrt.pop %v988
    %v991 = vrsqrt.pop %v989
    %v992 = vmul.f32 %v976, %v990
    %v993 = vmul.f32 %v977, %v991
    %v994 = vlaneseq
    %v995 = vshrl.u32 %v994, 7
    %v996 = vsub.s32 4, %v995
    %v997 = vrot.slane %v91, %v996
    %v998 = vmul.f32 %v992, %v997
    %v999 = vmul.f32 %v993, %v997
    %v1000 = vlaneseq
    %v1001 = vshrl.u32 %v1000, 7
    %v1002 = vsub.s32 5, %v1001
    %v1003 = vrot.slane %v91, %v1002
    %v1004 = vadd.f32 %v998, %v1003
    %v1005 = vadd.f32 %v999, %v1003
    %s1006 = scalar_lea.vmem %s9, 8
    %v1007 = vld [vmem:[%s1006] sm:$0x3f]
    %v1008 = vpack.c.bf16 %v1005, %v1004
    %s1009 = scalar_lea.vmem %s3, 16
    %v1010 = vld [vmem:[%s1009] sm:$0xf]
    %v1011 = vld [vmem:[%s1009 + $0x4] sm:$0xf]
    %v1012 = vld [vmem:[%s1009 + $0x8] sm:$0xf]
    %v1013 = vld [vmem:[%s1009 + $0xc] sm:$0xf]
    %s1014 = scalar_lea.vmem %s4, 1
    %v1015 = vld [vmem:[%s1014] sm:$0x1]
    %v1017 = vlaneseq
    %v1018 = vshrl.u32 %v1017, 7
    %v1019 = vsub.s32 0, %v1018
    %v1020 = vrot.slane %v1015, %v1019
    %v1026 = vunpack.c.l.b16 %v1010
    %v1027 = vunpack.c.l.b16 %v1011
    %v1028 = vunpack.c.l.b16 %v1012
    %v1029 = vunpack.c.l.b16 %v1013
    %v1030 = vpack.c.b16 %v1027, %v1026
    %v1031 = vpack.c.b16 %v1029, %v1028
    %v1035 = vsel %vm49, %v1008, 0
    %1037 = vmatprep.subr.bf16.mxu0 0
    %1038 = vmatpush1.bf16.msra.mxu0 %v1030
    %1039 = vmatprep.subr.bf16.mxu0 0
    %1040 = vmatpush1.bf16.msra.mxu0 %v1031
    %1041 = vmatprep.subr.bf16.mxu0 0
    %1042 = vmatpush1.bf16.msra.mxu0 0
    %1043 = vmatprep.subr.bf16.mxu0 0
    %1044 = vmatpush1.bf16.msra.mxu0 0
    %1045 = vmatprep.subr.bf16.mxu0 0
    %1046 = vmatpush1.bf16.msra.mxu0 0
    %1047 = vmatprep.subr.bf16.mxu0 0
    %1048 = vmatpush1.bf16.msra.mxu0 0
    %1049 = vmatprep.subr.bf16.mxu0 0
    %1050 = vmatpush1.bf16.msra.mxu0 0
    %1051 = vmatprep.subr.bf16.mxu0 0
    %1052 = vmatpush1.bf16.msra.mxu0 0
    %1053 = vmatprep.subr.bf16.mxu0 0
    %1054 = vmatpush1.bf16.msra.mxu0 0
    %1055 = vmatprep.subr.bf16.mxu0 0
    %1056 = vmatpush1.bf16.msra.mxu0 0
    %1057 = vmatprep.subr.bf16.mxu0 0
    %1058 = vmatpush1.bf16.msra.mxu0 0
    %1059 = vmatprep.subr.bf16.mxu0 0
    %1060 = vmatpush1.bf16.msra.mxu0 0
    %1061 = vmatprep.subr.bf16.mxu0 0
    %1062 = vmatpush1.bf16.msra.mxu0 0
    %1063 = vmatprep.subr.bf16.mxu0 0
    %1064 = vmatpush1.bf16.msra.mxu0 0
    %1065 = vmatprep.subr.bf16.mxu0 0
    %1066 = vmatpush1.bf16.msra.mxu0 0
    %1067 = vmatprep.subr.bf16.mxu0 0
    %1068 = vmatpush1.bf16.msra.mxu0 0
    %1069 = vmatprep.mubr.bf16.mxu0 0
    %1070 = vmatmul.mubr.bf16.gmra.mrb[0].mxu0 %v1035
    %v1071 = vpop.f32.mrb[0].mxu0
    %v1072 = vadd.f32 %v1020, %v1071
    %v1073 = vpop.f32.mrb[0].mxu0
    %v1074 = vpop.f32.mrb[0].mxu0
    %v1075 = vadd.f32 %v1020, %v1074
    %v1076 = vpop.f32.mrb[0].mxu0
    %1077 = vdwg.mxu0
    %v1078 = vpack.c.bf16 %v1075, %v1072
    %1080 = vrot.lane.b32.xlu0 %v1078, 96
    %v1081 = vpop.permute.xlu0 %1080
    %v1083 = vsel %vm164, %v1078, 0
    %v1086 = vsel %vm164, %v1081, 0
    %1088 = vmatprep.subr.bf16.mxu0 0
    %1089 = vmatpush1.bf16.xpose.msra.mxu0 %v1086
    %1090 = vmatprep.subr.bf16.mxu0 0
    %1091 = vmatpush1.bf16.xpose.msra.mxu0 0
    %1092 = vmatprep.subr.bf16.mxu0 0
    %1093 = vmatpush1.bf16.xpose.msra.mxu0 0
    %1094 = vmatprep.subr.bf16.mxu0 0
    %1095 = vmatpush1.bf16.xpose.msra.mxu0 0
    %1096 = vmatprep.subr.bf16.mxu0 0
    %1097 = vmatpush1.bf16.xpose.msra.mxu0 0
    %1098 = vmatprep.subr.bf16.mxu0 0
    %1099 = vmatpush1.bf16.xpose.msra.mxu0 0
    %1100 = vmatprep.subr.bf16.mxu0 0
    %1101 = vmatpush1.bf16.xpose.msra.mxu0 0
    %1102 = vmatprep.subr.bf16.mxu0 0
    %1103 = vmatpush1.bf16.xpose.msra.mxu0 0
    %1104 = vmatprep.subr.bf16.mxu0 0
    %1105 = vmatpush1.bf16.xpose.msra.mxu0 0
    %1106 = vmatprep.subr.bf16.mxu0 0
    %1107 = vmatpush1.bf16.xpose.msra.mxu0 0
    %1108 = vmatprep.subr.bf16.mxu0 0
    %1109 = vmatpush1.bf16.xpose.msra.mxu0 0
    %1110 = vmatprep.subr.bf16.mxu0 0
    %1111 = vmatpush1.bf16.xpose.msra.mxu0 0
    %1112 = vmatprep.subr.bf16.mxu0 0
    %1113 = vmatpush1.bf16.xpose.msra.mxu0 0
    %1114 = vmatprep.subr.bf16.mxu0 0
    %1115 = vmatpush1.bf16.xpose.msra.mxu0 0
    %1116 = vmatprep.subr.bf16.mxu0 0
    %1117 = vmatpush1.bf16.xpose.msra.mxu0 0
    %1118 = vmatprep.subr.bf16.mxu0 0
    %1119 = vmatpush1.bf16.xpose.msra.mxu0 0
    %1120 = vmatprep.mubr.bf16.mxu0 0
    %1121 = vmatmul.mubr.bf16.gmra.mrb[0].mxu0 %v1083
    %v1122 = vpop.f32.mrb[0].mxu0
    %v1123 = vadd.f32 0.0, %v1122
    %v1124 = vpop.f32.mrb[0].mxu0
    %v1125 = vpop.f32.mrb[0].mxu0
    %v1126 = vadd.f32 0.0, %v1125
    %v1127 = vpop.f32.mrb[0].mxu0
    %1128 = vdwg.mxu0
    %v1129 = vmul.f32 %v1123, 0.35355338
    %v1130 = vmul.f32 %v1126, 0.35355338
    %v1131 = vadd.f32 %v1129, %v89
    %v1132 = vadd.f32 %v1130, %v90
    %v1133 = vsel %vm216, %v1131, -inf
    %1134 = vmax.xlane.f32.xlu0 %v1133
    %v1135 = vpop.xlane.xlu0 %1134
    %v1136 = vsel %vm216, %v1132, -inf
    %1137 = vmax.xlane.f32.xlu0 %v1136
    %v1138 = vpop.xlane.xlu0 %1137
    %v1139 = vsub.f32 %v1131, %v1135
    %v1140 = vsub.f32 %v1132, %v1138
    %v1141 = vmul.f32 %v1139, 1.442695
    %v1142 = vpow.pop %v1141
    %v1143 = vmul.f32 %v1140, 1.442695
    %v1144 = vpow.pop %v1143
    %v1145 = vsel %vm216, %v1142, 0.0
    %1146 = vadd.xlane.f32.xlu0 %v1145
    %v1147 = vpop.xlane.xlu0 %1146
    %v1148 = vsel %vm216, %v1144, 0.0
    %1149 = vadd.xlane.f32.xlu0 %v1148
    %v1150 = vpop.xlane.xlu0 %1149
    %v1151 = vrcp.pop %v1147
    %v1152 = vrcp.pop %v1150
    %v1153 = vmul.f32 %v1142, %v1151
    %v1154 = vmul.f32 %v1144, %v1152
    %v1155 = vpack.c.bf16 %v1154, %v1153
    %1156 = vrot.lane.b32.xlu0 %v1078, 64
    %v1157 = vpop.permute.xlu0 %1156
    %v1160 = vsel %vm216, %v1155, 0
    %1162 = vmatprep.subr.bf16.mxu0 0
    %1163 = vmatpush1.bf16.msra.mxu0 %v1157
    %1164 = vmatprep.subr.bf16.mxu0 0
    %1165 = vmatpush1.bf16.msra.mxu0 0
    %1166 = vmatprep.subr.bf16.mxu0 0
    %1167 = vmatpush1.bf16.msra.mxu0 0
    %1168 = vmatprep.subr.bf16.mxu0 0
    %1169 = vmatpush1.bf16.msra.mxu0 0
    %1170 = vmatprep.subr.bf16.mxu0 0
    %1171 = vmatpush1.bf16.msra.mxu0 0
    %1172 = vmatprep.subr.bf16.mxu0 0
    %1173 = vmatpush1.bf16.msra.mxu0 0
    %1174 = vmatprep.subr.bf16.mxu0 0
    %1175 = vmatpush1.bf16.msra.mxu0 0
    %1176 = vmatprep.subr.bf16.mxu0 0
    %1177 = vmatpush1.bf16.msra.mxu0 0
    %1178 = vmatprep.subr.bf16.mxu0 0
    %1179 = vmatpush1.bf16.msra.mxu0 0
    %1180 = vmatprep.subr.bf16.mxu0 0
    %1181 = vmatpush1.bf16.msra.mxu0 0
    %1182 = vmatprep.subr.bf16.mxu0 0
    %1183 = vmatpush1.bf16.msra.mxu0 0
    %1184 = vmatprep.subr.bf16.mxu0 0
    %1185 = vmatpush1.bf16.msra.mxu0 0
    %1186 = vmatprep.subr.bf16.mxu0 0
    %1187 = vmatpush1.bf16.msra.mxu0 0
    %1188 = vmatprep.subr.bf16.mxu0 0
    %1189 = vmatpush1.bf16.msra.mxu0 0
    %1190 = vmatprep.subr.bf16.mxu0 0
    %1191 = vmatpush1.bf16.msra.mxu0 0
    %1192 = vmatprep.subr.bf16.mxu0 0
    %1193 = vmatpush1.bf16.msra.mxu0 0
    %1194 = vmatprep.mubr.bf16.mxu0 0
    %1195 = vmatmul.mubr.bf16.gmra.mrb[0].mxu0 %v1160
    %v1196 = vpop.f32.mrb[0].mxu0
    %v1197 = vadd.f32 0.0, %v1196
    %v1198 = vpop.f32.mrb[0].mxu0
    %v1199 = vpop.f32.mrb[0].mxu0
    %v1200 = vadd.f32 0.0, %v1199
    %v1201 = vpop.f32.mrb[0].mxu0
    %1202 = vdwg.mxu0
    %1203 = vrot.lane.b32.xlu0 %v1078, 120
    %v1204 = vpop.permute.xlu0 %1203
    %1205 = vrot.lane.b32.xlu0 %v1078, 88
    %v1206 = vpop.permute.xlu0 %1205
    %v1208 = vsel %vm164, %v1204, 0
    %v1211 = vsel %vm164, %v1206, 0
    %1213 = vmatprep.subr.bf16.mxu0 0
    %1214 = vmatpush1.bf16.xpose.msra.mxu0 %v1211
    %1215 = vmatprep.subr.bf16.mxu0 0
    %1216 = vmatpush1.bf16.xpose.msra.mxu0 0
    %1217 = vmatprep.subr.bf16.mxu0 0
    %1218 = vmatpush1.bf16.xpose.msra.mxu0 0
    %1219 = vmatprep.subr.bf16.mxu0 0
    %1220 = vmatpush1.bf16.xpose.msra.mxu0 0
    %1221 = vmatprep.subr.bf16.mxu0 0
    %1222 = vmatpush1.bf16.xpose.msra.mxu0 0
    %1223 = vmatprep.subr.bf16.mxu0 0
    %1224 = vmatpush1.bf16.xpose.msra.mxu0 0
    %1225 = vmatprep.subr.bf16.mxu0 0
    %1226 = vmatpush1.bf16.xpose.msra.mxu0 0
    %1227 = vmatprep.subr.bf16.mxu0 0
    %1228 = vmatpush1.bf16.xpose.msra.mxu0 0
    %1229 = vmatprep.subr.bf16.mxu0 0
    %1230 = vmatpush1.bf16.xpose.msra.mxu0 0
    %1231 = vmatprep.subr.bf16.mxu0 0
    %1232 = vmatpush1.bf16.xpose.msra.mxu0 0
    %1233 = vmatprep.subr.bf16.mxu0 0
    %1234 = vmatpush1.bf16.xpose.msra.mxu0 0
    %1235 = vmatprep.subr.bf16.mxu0 0
    %1236 = vmatpush1.bf16.xpose.msra.mxu0 0
    %1237 = vmatprep.subr.bf16.mxu0 0
    %1238 = vmatpush1.bf16.xpose.msra.mxu0 0
    %1239 = vmatprep.subr.bf16.mxu0 0
    %1240 = vmatpush1.bf16.xpose.msra.mxu0 0
    %1241 = vmatprep.subr.bf16.mxu0 0
    %1242 = vmatpush1.bf16.xpose.msra.mxu0 0
    %1243 = vmatprep.subr.bf16.mxu0 0
    %1244 = vmatpush1.bf16.xpose.msra.mxu0 0
    %1245 = vmatprep.mubr.bf16.mxu0 0
    %1246 = vmatmul.mubr.bf16.gmra.mrb[0].mxu0 %v1208
    %v1247 = vpop.f32.mrb[0].mxu0
    %v1248 = vadd.f32 0.0, %v1247
    %v1249 = vpop.f32.mrb[0].mxu0
    %v1250 = vpop.f32.mrb[0].mxu0
    %v1251 = vadd.f32 0.0, %v1250
    %v1252 = vpop.f32.mrb[0].mxu0
    %1253 = vdwg.mxu0
    %v1254 = vmul.f32 %v1248, 0.35355338
    %v1255 = vmul.f32 %v1251, 0.35355338
    %v1256 = vadd.f32 %v1254, %v89
    %v1257 = vadd.f32 %v1255, %v90
    %v1258 = vsel %vm216, %v1256, -inf
    %1259 = vmax.xlane.f32.xlu0 %v1258
    %v1260 = vpop.xlane.xlu0 %1259
    %v1261 = vsel %vm216, %v1257, -inf
    %1262 = vmax.xlane.f32.xlu0 %v1261
    %v1263 = vpop.xlane.xlu0 %1262
    %v1264 = vsub.f32 %v1256, %v1260
    %v1265 = vsub.f32 %v1257, %v1263
    %v1266 = vmul.f32 %v1264, 1.442695
    %v1267 = vpow.pop %v1266
    %v1268 = vmul.f32 %v1265, 1.442695
    %v1269 = vpow.pop %v1268
    %v1270 = vsel %vm216, %v1267, 0.0
    %1271 = vadd.xlane.f32.xlu0 %v1270
    %v1272 = vpop.xlane.xlu0 %1271
    %v1273 = vsel %vm216, %v1269, 0.0
    %1274 = vadd.xlane.f32.xlu0 %v1273
    %v1275 = vpop.xlane.xlu0 %1274
    %v1276 = vrcp.pop %v1272
    %v1277 = vrcp.pop %v1275
    %v1278 = vmul.f32 %v1267, %v1276
    %v1279 = vmul.f32 %v1269, %v1277
    %v1280 = vpack.c.bf16 %v1279, %v1278
    %1281 = vrot.lane.b32.xlu0 %v1078, 56
    %v1282 = vpop.permute.xlu0 %1281
    %v1285 = vsel %vm216, %v1280, 0
    %1287 = vmatprep.subr.bf16.mxu0 0
    %1288 = vmatpush1.bf16.msra.mxu0 %v1282
    %1289 = vmatprep.subr.bf16.mxu0 0
    %1290 = vmatpush1.bf16.msra.mxu0 0
    %1291 = vmatprep.subr.bf16.mxu0 0
    %1292 = vmatpush1.bf16.msra.mxu0 0
    %1293 = vmatprep.subr.bf16.mxu0 0
    %1294 = vmatpush1.bf16.msra.mxu0 0
    %1295 = vmatprep.subr.bf16.mxu0 0
    %1296 = vmatpush1.bf16.msra.mxu0 0
    %1297 = vmatprep.subr.bf16.mxu0 0
    %1298 = vmatpush1.bf16.msra.mxu0 0
    %1299 = vmatprep.subr.bf16.mxu0 0
    %1300 = vmatpush1.bf16.msra.mxu0 0
    %1301 = vmatprep.subr.bf16.mxu0 0
    %1302 = vmatpush1.bf16.msra.mxu0 0
    %1303 = vmatprep.subr.bf16.mxu0 0
    %1304 = vmatpush1.bf16.msra.mxu0 0
    %1305 = vmatprep.subr.bf16.mxu0 0
    %1306 = vmatpush1.bf16.msra.mxu0 0
    %1307 = vmatprep.subr.bf16.mxu0 0
    %1308 = vmatpush1.bf16.msra.mxu0 0
    %1309 = vmatprep.subr.bf16.mxu0 0
    %1310 = vmatpush1.bf16.msra.mxu0 0
    %1311 = vmatprep.subr.bf16.mxu0 0
    %1312 = vmatpush1.bf16.msra.mxu0 0
    %1313 = vmatprep.subr.bf16.mxu0 0
    %1314 = vmatpush1.bf16.msra.mxu0 0
    %1315 = vmatprep.subr.bf16.mxu0 0
    %1316 = vmatpush1.bf16.msra.mxu0 0
    %1317 = vmatprep.subr.bf16.mxu0 0
    %1318 = vmatpush1.bf16.msra.mxu0 0
    %1319 = vmatprep.mubr.bf16.mxu0 0
    %1320 = vmatmul.mubr.bf16.gmra.mrb[0].mxu0 %v1285
    %v1321 = vpop.f32.mrb[0].mxu0
    %v1322 = vadd.f32 0.0, %v1321
    %v1323 = vpop.f32.mrb[0].mxu0
    %v1324 = vpop.f32.mrb[0].mxu0
    %v1325 = vadd.f32 0.0, %v1324
    %v1326 = vpop.f32.mrb[0].mxu0
    %1327 = vdwg.mxu0
    %1328 = vrot.lane.b32.xlu0 %v1078, 112
    %v1329 = vpop.permute.xlu0 %1328
    %1330 = vrot.lane.b32.xlu0 %v1078, 80
    %v1331 = vpop.permute.xlu0 %1330
    %v1333 = vsel %vm164, %v1329, 0
    %v1336 = vsel %vm164, %v1331, 0
    %1338 = vmatprep.subr.bf16.mxu0 0
    %1339 = vmatpush1.bf16.xpose.msra.mxu0 %v1336
    %1340 = vmatprep.subr.bf16.mxu0 0
    %1341 = vmatpush1.bf16.xpose.msra.mxu0 0
    %1342 = vmatprep.subr.bf16.mxu0 0
    %1343 = vmatpush1.bf16.xpose.msra.mxu0 0
    %1344 = vmatprep.subr.bf16.mxu0 0
    %1345 = vmatpush1.bf16.xpose.msra.mxu0 0
    %1346 = vmatprep.subr.bf16.mxu0 0
    %1347 = vmatpush1.bf16.xpose.msra.mxu0 0
    %1348 = vmatprep.subr.bf16.mxu0 0
    %1349 = vmatpush1.bf16.xpose.msra.mxu0 0
    %1350 = vmatprep.subr.bf16.mxu0 0
    %1351 = vmatpush1.bf16.xpose.msra.mxu0 0
    %1352 = vmatprep.subr.bf16.mxu0 0
    %1353 = vmatpush1.bf16.xpose.msra.mxu0 0
    %1354 = vmatprep.subr.bf16.mxu0 0
    %1355 = vmatpush1.bf16.xpose.msra.mxu0 0
    %1356 = vmatprep.subr.bf16.mxu0 0
    %1357 = vmatpush1.bf16.xpose.msra.mxu0 0
    %1358 = vmatprep.subr.bf16.mxu0 0
    %1359 = vmatpush1.bf16.xpose.msra.mxu0 0
    %1360 = vmatprep.subr.bf16.mxu0 0
    %1361 = vmatpush1.bf16.xpose.msra.mxu0 0
    %1362 = vmatprep.subr.bf16.mxu0 0
    %1363 = vmatpush1.bf16.xpose.msra.mxu0 0
    %1364 = vmatprep.subr.bf16.mxu0 0
    %1365 = vmatpush1.bf16.xpose.msra.mxu0 0
    %1366 = vmatprep.subr.bf16.mxu0 0
    %1367 = vmatpush1.bf16.xpose.msra.mxu0 0
    %1368 = vmatprep.subr.bf16.mxu0 0
    %1369 = vmatpush1.bf16.xpose.msra.mxu0 0
    %1370 = vmatprep.mubr.bf16.mxu0 0
    %1371 = vmatmul.mubr.bf16.gmra.mrb[0].mxu0 %v1333
    %v1372 = vpop.f32.mrb[0].mxu0
    %v1373 = vadd.f32 0.0, %v1372
    %v1374 = vpop.f32.mrb[0].mxu0
    %v1375 = vpop.f32.mrb[0].mxu0
    %v1376 = vadd.f32 0.0, %v1375
    %v1377 = vpop.f32.mrb[0].mxu0
    %1378 = vdwg.mxu0
    %v1379 = vmul.f32 %v1373, 0.35355338
    %v1380 = vmul.f32 %v1376, 0.35355338
    %v1381 = vadd.f32 %v1379, %v89
    %v1382 = vadd.f32 %v1380, %v90
    %v1383 = vsel %vm216, %v1381, -inf
    %1384 = vmax.xlane.f32.xlu0 %v1383
    %v1385 = vpop.xlane.xlu0 %1384
    %v1386 = vsel %vm216, %v1382, -inf
    %1387 = vmax.xlane.f32.xlu0 %v1386
    %v1388 = vpop.xlane.xlu0 %1387
    %v1389 = vsub.f32 %v1381, %v1385
    %v1390 = vsub.f32 %v1382, %v1388
    %v1391 = vmul.f32 %v1389, 1.442695
    %v1392 = vpow.pop %v1391
    %v1393 = vmul.f32 %v1390, 1.442695
    %v1394 = vpow.pop %v1393
    %v1395 = vsel %vm216, %v1392, 0.0
    %1396 = vadd.xlane.f32.xlu0 %v1395
    %v1397 = vpop.xlane.xlu0 %1396
    %v1398 = vsel %vm216, %v1394, 0.0
    %1399 = vadd.xlane.f32.xlu0 %v1398
    %v1400 = vpop.xlane.xlu0 %1399
    %v1401 = vrcp.pop %v1397
    %v1402 = vrcp.pop %v1400
    %v1403 = vmul.f32 %v1392, %v1401
    %v1404 = vmul.f32 %v1394, %v1402
    %v1405 = vpack.c.bf16 %v1404, %v1403
    %1406 = vrot.lane.b32.xlu0 %v1078, 48
    %v1407 = vpop.permute.xlu0 %1406
    %v1410 = vsel %vm216, %v1405, 0
    %1412 = vmatprep.subr.bf16.mxu0 0
    %1413 = vmatpush1.bf16.msra.mxu0 %v1407
    %1414 = vmatprep.subr.bf16.mxu0 0
    %1415 = vmatpush1.bf16.msra.mxu0 0
    %1416 = vmatprep.subr.bf16.mxu0 0
    %1417 = vmatpush1.bf16.msra.mxu0 0
    %1418 = vmatprep.subr.bf16.mxu0 0
    %1419 = vmatpush1.bf16.msra.mxu0 0
    %1420 = vmatprep.subr.bf16.mxu0 0
    %1421 = vmatpush1.bf16.msra.mxu0 0
    %1422 = vmatprep.subr.bf16.mxu0 0
    %1423 = vmatpush1.bf16.msra.mxu0 0
    %1424 = vmatprep.subr.bf16.mxu0 0
    %1425 = vmatpush1.bf16.msra.mxu0 0
    %1426 = vmatprep.subr.bf16.mxu0 0
    %1427 = vmatpush1.bf16.msra.mxu0 0
    %1428 = vmatprep.subr.bf16.mxu0 0
    %1429 = vmatpush1.bf16.msra.mxu0 0
    %1430 = vmatprep.subr.bf16.mxu0 0
    %1431 = vmatpush1.bf16.msra.mxu0 0
    %1432 = vmatprep.subr.bf16.mxu0 0
    %1433 = vmatpush1.bf16.msra.mxu0 0
    %1434 = vmatprep.subr.bf16.mxu0 0
    %1435 = vmatpush1.bf16.msra.mxu0 0
    %1436 = vmatprep.subr.bf16.mxu0 0
    %1437 = vmatpush1.bf16.msra.mxu0 0
    %1438 = vmatprep.subr.bf16.mxu0 0
    %1439 = vmatpush1.bf16.msra.mxu0 0
    %1440 = vmatprep.subr.bf16.mxu0 0
    %1441 = vmatpush1.bf16.msra.mxu0 0
    %1442 = vmatprep.subr.bf16.mxu0 0
    %1443 = vmatpush1.bf16.msra.mxu0 0
    %1444 = vmatprep.mubr.bf16.mxu0 0
    %1445 = vmatmul.mubr.bf16.gmra.mrb[0].mxu0 %v1410
    %v1446 = vpop.f32.mrb[0].mxu0
    %v1447 = vadd.f32 0.0, %v1446
    %v1448 = vpop.f32.mrb[0].mxu0
    %v1449 = vpop.f32.mrb[0].mxu0
    %v1450 = vadd.f32 0.0, %v1449
    %v1451 = vpop.f32.mrb[0].mxu0
    %1452 = vdwg.mxu0
    %1453 = vrot.lane.b32.xlu0 %v1078, 104
    %v1454 = vpop.permute.xlu0 %1453
    %1455 = vrot.lane.b32.xlu0 %v1078, 72
    %v1456 = vpop.permute.xlu0 %1455
    %v1458 = vsel %vm164, %v1454, 0
    %v1461 = vsel %vm164, %v1456, 0
    %1463 = vmatprep.subr.bf16.mxu0 0
    %1464 = vmatpush1.bf16.xpose.msra.mxu0 %v1461
    %1465 = vmatprep.subr.bf16.mxu0 0
    %1466 = vmatpush1.bf16.xpose.msra.mxu0 0
    %1467 = vmatprep.subr.bf16.mxu0 0
    %1468 = vmatpush1.bf16.xpose.msra.mxu0 0
    %1469 = vmatprep.subr.bf16.mxu0 0
    %1470 = vmatpush1.bf16.xpose.msra.mxu0 0
    %1471 = vmatprep.subr.bf16.mxu0 0
    %1472 = vmatpush1.bf16.xpose.msra.mxu0 0
    %1473 = vmatprep.subr.bf16.mxu0 0
    %1474 = vmatpush1.bf16.xpose.msra.mxu0 0
    %1475 = vmatprep.subr.bf16.mxu0 0
    %1476 = vmatpush1.bf16.xpose.msra.mxu0 0
    %1477 = vmatprep.subr.bf16.mxu0 0
    %1478 = vmatpush1.bf16.xpose.msra.mxu0 0
    %1479 = vmatprep.subr.bf16.mxu0 0
    %1480 = vmatpush1.bf16.xpose.msra.mxu0 0
    %1481 = vmatprep.subr.bf16.mxu0 0
    %1482 = vmatpush1.bf16.xpose.msra.mxu0 0
    %1483 = vmatprep.subr.bf16.mxu0 0
    %1484 = vmatpush1.bf16.xpose.msra.mxu0 0
    %1485 = vmatprep.subr.bf16.mxu0 0
    %1486 = vmatpush1.bf16.xpose.msra.mxu0 0
    %1487 = vmatprep.subr.bf16.mxu0 0
    %1488 = vmatpush1.bf16.xpose.msra.mxu0 0
    %1489 = vmatprep.subr.bf16.mxu0 0
    %1490 = vmatpush1.bf16.xpose.msra.mxu0 0
    %1491 = vmatprep.subr.bf16.mxu0 0
    %1492 = vmatpush1.bf16.xpose.msra.mxu0 0
    %1493 = vmatprep.subr.bf16.mxu0 0
    %1494 = vmatpush1.bf16.xpose.msra.mxu0 0
    %1495 = vmatprep.mubr.bf16.mxu0 0
    %1496 = vmatmul.mubr.bf16.gmra.mrb[0].mxu0 %v1458
    %v1497 = vpop.f32.mrb[0].mxu0
    %v1498 = vadd.f32 0.0, %v1497
    %v1499 = vpop.f32.mrb[0].mxu0
    %v1500 = vpop.f32.mrb[0].mxu0
    %v1501 = vadd.f32 0.0, %v1500
    %v1502 = vpop.f32.mrb[0].mxu0
    %1503 = vdwg.mxu0
    %v1504 = vmul.f32 %v1498, 0.35355338
    %v1505 = vmul.f32 %v1501, 0.35355338
    %v1506 = vadd.f32 %v1504, %v89
    %v1507 = vadd.f32 %v1505, %v90
    %v1508 = vsel %vm216, %v1506, -inf
    %1509 = vmax.xlane.f32.xlu0 %v1508
    %v1510 = vpop.xlane.xlu0 %1509
    %v1511 = vsel %vm216, %v1507, -inf
    %1512 = vmax.xlane.f32.xlu0 %v1511
    %v1513 = vpop.xlane.xlu0 %1512
    %v1514 = vsub.f32 %v1506, %v1510
    %v1515 = vsub.f32 %v1507, %v1513
    %v1516 = vmul.f32 %v1514, 1.442695
    %v1517 = vpow.pop %v1516
    %v1518 = vmul.f32 %v1515, 1.442695
    %v1519 = vpow.pop %v1518
    %v1520 = vsel %vm216, %v1517, 0.0
    %1521 = vadd.xlane.f32.xlu0 %v1520
    %v1522 = vpop.xlane.xlu0 %1521
    %v1523 = vsel %vm216, %v1519, 0.0
    %1524 = vadd.xlane.f32.xlu0 %v1523
    %v1525 = vpop.xlane.xlu0 %1524
    %v1526 = vrcp.pop %v1522
    %v1527 = vrcp.pop %v1525
    %v1528 = vmul.f32 %v1517, %v1526
    %v1529 = vmul.f32 %v1519, %v1527
    %v1530 = vpack.c.bf16 %v1529, %v1528
    %1531 = vrot.lane.b32.xlu0 %v1078, 40
    %v1532 = vpop.permute.xlu0 %1531
    %v1535 = vsel %vm216, %v1530, 0
    %1537 = vmatprep.subr.bf16.mxu0 0
    %1538 = vmatpush1.bf16.msra.mxu0 %v1532
    %1539 = vmatprep.subr.bf16.mxu0 0
    %1540 = vmatpush1.bf16.msra.mxu0 0
    %1541 = vmatprep.subr.bf16.mxu0 0
    %1542 = vmatpush1.bf16.msra.mxu0 0
    %1543 = vmatprep.subr.bf16.mxu0 0
    %1544 = vmatpush1.bf16.msra.mxu0 0
    %1545 = vmatprep.subr.bf16.mxu0 0
    %1546 = vmatpush1.bf16.msra.mxu0 0
    %1547 = vmatprep.subr.bf16.mxu0 0
    %1548 = vmatpush1.bf16.msra.mxu0 0
    %1549 = vmatprep.subr.bf16.mxu0 0
    %1550 = vmatpush1.bf16.msra.mxu0 0
    %1551 = vmatprep.subr.bf16.mxu0 0
    %1552 = vmatpush1.bf16.msra.mxu0 0
    %1553 = vmatprep.subr.bf16.mxu0 0
    %1554 = vmatpush1.bf16.msra.mxu0 0
    %1555 = vmatprep.subr.bf16.mxu0 0
    %1556 = vmatpush1.bf16.msra.mxu0 0
    %1557 = vmatprep.subr.bf16.mxu0 0
    %1558 = vmatpush1.bf16.msra.mxu0 0
    %1559 = vmatprep.subr.bf16.mxu0 0
    %1560 = vmatpush1.bf16.msra.mxu0 0
    %1561 = vmatprep.subr.bf16.mxu0 0
    %1562 = vmatpush1.bf16.msra.mxu0 0
    %1563 = vmatprep.subr.bf16.mxu0 0
    %1564 = vmatpush1.bf16.msra.mxu0 0
    %1565 = vmatprep.subr.bf16.mxu0 0
    %1566 = vmatpush1.bf16.msra.mxu0 0
    %1567 = vmatprep.subr.bf16.mxu0 0
    %1568 = vmatpush1.bf16.msra.mxu0 0
    %1569 = vmatprep.mubr.bf16.mxu0 0
    %1570 = vmatmul.mubr.bf16.gmra.mrb[0].mxu0 %v1535
    %v1571 = vpop.f32.mrb[0].mxu0
    %v1572 = vadd.f32 0.0, %v1571
    %v1573 = vpop.f32.mrb[0].mxu0
    %v1574 = vpop.f32.mrb[0].mxu0
    %v1575 = vadd.f32 0.0, %v1574
    %v1576 = vpop.f32.mrb[0].mxu0
    %1577 = vdwg.mxu0
    %1580 = vrot.lane.b32.xlu0 %v1322, 8
    %v1581 = vpop.permute.xlu0 %1580
    %1582 = vrot.lane.b32.xlu0 %v1325, 8
    %v1583 = vpop.permute.xlu0 %1582
    %1588 = vrot.lane.b32.xlu0 %v1447, 16
    %v1589 = vpop.permute.xlu0 %1588
    %1590 = vrot.lane.b32.xlu0 %v1450, 16
    %v1591 = vpop.permute.xlu0 %1590
    %1596 = vrot.lane.b32.xlu0 %v1572, 24
    %v1597 = vpop.permute.xlu0 %1596
    %1598 = vrot.lane.b32.xlu0 %v1575, 24
    %v1599 = vpop.permute.xlu0 %1598
    %v1602 = vsel %vm164, %v1197, %v1581
    %v1603 = vsel %vm164, %v1200, %v1583
    %v1604 = vsel %vm216, %v1602, %v1589
    %v1605 = vsel %vm216, %v1603, %v1591
    %v1606 = vsel %vm690, %v1604, %v1597
    %v1607 = vsel %vm690, %v1605, %v1599
    %v1608 = vpack.c.bf16 %v1607, %v1606
    %s1609 = scalar_lea.vmem %s5, 16
    %v1610 = vld [vmem:[%s1609] sm:$0xf]
    %v1611 = vld [vmem:[%s1609 + $0x4] sm:$0xf]
    %v1612 = vld [vmem:[%s1609 + $0x8] sm:$0xf]
    %v1613 = vld [vmem:[%s1609 + $0xc] sm:$0xf]
    %v1614 = vlaneseq
    %v1615 = vshrl.u32 %v1614, 7
    %v1616 = vsub.s32 0, %v1615
    %v1617 = vrot.slane %v1007, %v1616
    %v1622 = vunpack.c.l.b16 %v1610
    %v1623 = vunpack.c.l.b16 %v1611
    %v1624 = vunpack.c.l.b16 %v1612
    %v1625 = vunpack.c.l.b16 %v1613
    %v1626 = vpack.c.b16 %v1623, %v1622
    %v1627 = vpack.c.b16 %v1625, %v1624
    %v1631 = vsel %vm49, %v1608, 0
    %1633 = vmatprep.subr.bf16.mxu0 0
    %1634 = vmatpush1.bf16.msra.mxu0 %v1626
    %1635 = vmatprep.subr.bf16.mxu0 0
    %1636 = vmatpush1.bf16.msra.mxu0 %v1627
    %1637 = vmatprep.subr.bf16.mxu0 0
    %1638 = vmatpush1.bf16.msra.mxu0 0
    %1639 = vmatprep.subr.bf16.mxu0 0
    %1640 = vmatpush1.bf16.msra.mxu0 0
    %1641 = vmatprep.subr.bf16.mxu0 0
    %1642 = vmatpush1.bf16.msra.mxu0 0
    %1643 = vmatprep.subr.bf16.mxu0 0
    %1644 = vmatpush1.bf16.msra.mxu0 0
    %1645 = vmatprep.subr.bf16.mxu0 0
    %1646 = vmatpush1.bf16.msra.mxu0 0
    %1647 = vmatprep.subr.bf16.mxu0 0
    %1648 = vmatpush1.bf16.msra.mxu0 0
    %1649 = vmatprep.subr.bf16.mxu0 0
    %1650 = vmatpush1.bf16.msra.mxu0 0
    %1651 = vmatprep.subr.bf16.mxu0 0
    %1652 = vmatpush1.bf16.msra.mxu0 0
    %1653 = vmatprep.subr.bf16.mxu0 0
    %1654 = vmatpush1.bf16.msra.mxu0 0
    %1655 = vmatprep.subr.bf16.mxu0 0
    %1656 = vmatpush1.bf16.msra.mxu0 0
    %1657 = vmatprep.subr.bf16.mxu0 0
    %1658 = vmatpush1.bf16.msra.mxu0 0
    %1659 = vmatprep.subr.bf16.mxu0 0
    %1660 = vmatpush1.bf16.msra.mxu0 0
    %1661 = vmatprep.subr.bf16.mxu0 0
    %1662 = vmatpush1.bf16.msra.mxu0 0
    %1663 = vmatprep.subr.bf16.mxu0 0
    %1664 = vmatpush1.bf16.msra.mxu0 0
    %1665 = vmatprep.mubr.bf16.mxu0 0
    %1666 = vmatmul.mubr.bf16.gmra.mrb[0].mxu0 %v1631
    %v1667 = vpop.f32.mrb[0].mxu0
    %v1668 = vadd.f32 %v1617, %v1667
    %v1669 = vpop.f32.mrb[0].mxu0
    %v1670 = vpop.f32.mrb[0].mxu0
    %v1671 = vadd.f32 %v1617, %v1670
    %v1672 = vpop.f32.mrb[0].mxu0
    %1673 = vdwg.mxu0
    %v1674 = vadd.f32 %v1004, %v1668
    %v1675 = vadd.f32 %v1005, %v1671
    %v1676 = vsel %vm49, %v1674, 0.0
    %1677 = vadd.xlane.f32.xlu0 %v1676
    %v1678 = vpop.xlane.xlu0 %1677
    %v1679 = vsel %vm49, %v1675, 0.0
    %1680 = vadd.xlane.f32.xlu0 %v1679
    %v1681 = vpop.xlane.xlu0 %1680
    %v1682 = vmul.f32 %v1678, %v56
    %v1683 = vmul.f32 %v1681, %v56
    %v1684 = vsub.f32 %v1674, %v1682
    %v1685 = vsub.f32 %v1675, %v1683
    %v1686 = vmul.f32 %v1684, %v1684
    %v1687 = vmul.f32 %v1685, %v1685
    %v1688 = vsel %vm49, %v1686, 0.0
    %1689 = vadd.xlane.f32.xlu0 %v1688
    %v1690 = vpop.xlane.xlu0 %1689
    %v1691 = vsel %vm49, %v1687, 0.0
    %1692 = vadd.xlane.f32.xlu0 %v1691
    %v1693 = vpop.xlane.xlu0 %1692
    %v1694 = vmul.f32 %v1690, %v56
    %v1695 = vmul.f32 %v1693, %v56
    %v1696 = vadd.f32 %v1694, 1e-12
    %v1697 = vadd.f32 %v1695, 1e-12
    %v1698 = vrsqrt.pop %v1696
    %v1699 = vrsqrt.pop %v1697
    %v1700 = vmul.f32 %v1684, %v1698
    %v1701 = vmul.f32 %v1685, %v1699
    %v1702 = vlaneseq
    %v1703 = vshrl.u32 %v1702, 7
    %v1704 = vsub.s32 1, %v1703
    %v1705 = vrot.slane %v1007, %v1704
    %v1706 = vmul.f32 %v1700, %v1705
    %v1707 = vmul.f32 %v1701, %v1705
    %v1708 = vlaneseq
    %v1709 = vshrl.u32 %v1708, 7
    %v1710 = vsub.s32 2, %v1709
    %v1711 = vrot.slane %v1007, %v1710
    %v1712 = vadd.f32 %v1706, %v1711
    %v1713 = vadd.f32 %v1707, %v1711
    %v1714 = vpack.c.bf16 %v1713, %v1712
    %s1715 = scalar_lea.vmem %s6, 16
    %v1716 = vld [vmem:[%s1715] sm:$0xf]
    %v1717 = vld [vmem:[%s1715 + $0x4] sm:$0xf]
    %v1718 = vld [vmem:[%s1715 + $0x8] sm:$0xf]
    %v1719 = vld [vmem:[%s1715 + $0xc] sm:$0xf]
    %s1720 = scalar_lea.vmem %s7, 1
    %v1721 = vld [vmem:[%s1720] sm:$0x1]
    %v1723 = vlaneseq
    %v1724 = vshrl.u32 %v1723, 7
    %v1725 = vsub.s32 0, %v1724
    %v1726 = vrot.slane %v1721, %v1725
    %v1732 = vunpack.c.l.b16 %v1716
    %v1733 = vunpack.c.l.b16 %v1717
    %v1734 = vunpack.c.l.b16 %v1718
    %v1735 = vunpack.c.l.b16 %v1719
    %v1736 = vpack.c.b16 %v1733, %v1732
    %v1737 = vpack.c.b16 %v1735, %v1734
    %v1741 = vsel %vm49, %v1714, 0
    %1743 = vmatprep.subr.bf16.mxu0 0
    %1744 = vmatpush1.bf16.msra.mxu0 %v1736
    %1745 = vmatprep.subr.bf16.mxu0 0
    %1746 = vmatpush1.bf16.msra.mxu0 %v1737
    %1747 = vmatprep.subr.bf16.mxu0 0
    %1748 = vmatpush1.bf16.msra.mxu0 0
    %1749 = vmatprep.subr.bf16.mxu0 0
    %1750 = vmatpush1.bf16.msra.mxu0 0
    %1751 = vmatprep.subr.bf16.mxu0 0
    %1752 = vmatpush1.bf16.msra.mxu0 0
    %1753 = vmatprep.subr.bf16.mxu0 0
    %1754 = vmatpush1.bf16.msra.mxu0 0
    %1755 = vmatprep.subr.bf16.mxu0 0
    %1756 = vmatpush1.bf16.msra.mxu0 0
    %1757 = vmatprep.subr.bf16.mxu0 0
    %1758 = vmatpush1.bf16.msra.mxu0 0
    %1759 = vmatprep.subr.bf16.mxu0 0
    %1760 = vmatpush1.bf16.msra.mxu0 0
    %1761 = vmatprep.subr.bf16.mxu0 0
    %1762 = vmatpush1.bf16.msra.mxu0 0
    %1763 = vmatprep.subr.bf16.mxu0 0
    %1764 = vmatpush1.bf16.msra.mxu0 0
    %1765 = vmatprep.subr.bf16.mxu0 0
    %1766 = vmatpush1.bf16.msra.mxu0 0
    %1767 = vmatprep.subr.bf16.mxu0 0
    %1768 = vmatpush1.bf16.msra.mxu0 0
    %1769 = vmatprep.subr.bf16.mxu0 0
    %1770 = vmatpush1.bf16.msra.mxu0 0
    %1771 = vmatprep.subr.bf16.mxu0 0
    %1772 = vmatpush1.bf16.msra.mxu0 0
    %1773 = vmatprep.subr.bf16.mxu0 0
    %1774 = vmatpush1.bf16.msra.mxu0 0
    %1775 = vmatprep.mubr.bf16.mxu0 0
    %1776 = vmatmul.mubr.bf16.gmra.mrb[0].mxu0 %v1741
    %v1777 = vpop.f32.mrb[0].mxu0
    %v1778 = vadd.f32 %v1726, %v1777
    %v1779 = vpop.f32.mrb[0].mxu0
    %v1780 = vpop.f32.mrb[0].mxu0
    %v1781 = vadd.f32 %v1726, %v1780
    %v1782 = vpop.f32.mrb[0].mxu0
    %1783 = vdwg.mxu0
    %v1784 = vmul.f32 %v1778, %v1778
    %v1785 = vmul.f32 %v1781, %v1781
    %v1786 = vmul.f32 %v1778, %v1784
    %v1787 = vmul.f32 %v1781, %v1785
    %v1788 = vmul.f32 %v1786, 0.044715
    %v1789 = vmul.f32 %v1787, 0.044715
    %v1790 = vadd.f32 %v1778, %v1788
    %v1791 = vadd.f32 %v1781, %v1789
    %v1792 = vmul.f32 %v1790, 0.7978846
    %v1793 = vmul.f32 %v1791, 0.7978846
    %v1794 = vtanh.pop %v1792
    %v1795 = vtanh.pop %v1793
    %v1796 = vadd.f32 %v1794, 1.0
    %v1797 = vadd.f32 %v1795, 1.0
    %v1798 = vmul.f32 %v1796, 0.5
    %v1799 = vmul.f32 %v1797, 0.5
    %v1800 = vmul.f32 %v1778, %v1798
    %v1801 = vmul.f32 %v1781, %v1799
    %v1802 = vpack.c.bf16 %v1801, %v1800
    %s1803 = scalar_lea.vmem %s8, 32
    %v1804 = vld [vmem:[%s1803] sm:$0xf]
    %v1805 = vld [vmem:[%s1803 + $0x4] sm:$0xf]
    %v1806 = vld [vmem:[%s1803 + $0x8] sm:$0xf]
    %v1807 = vld [vmem:[%s1803 + $0xc] sm:$0xf]
    %v1808 = vld [vmem:[%s1803 + $0x10] sm:$0xf]
    %v1809 = vld [vmem:[%s1803 + $0x14] sm:$0xf]
    %v1810 = vld [vmem:[%s1803 + $0x18] sm:$0xf]
    %v1811 = vld [vmem:[%s1803 + $0x1c] sm:$0xf]
    %v1812 = vlaneseq
    %v1813 = vshrl.u32 %v1812, 7
    %v1814 = vsub.s32 3, %v1813
    %v1815 = vrot.slane %v1007, %v1814
    %v1824 = vunpack.c.l.b16 %v1804
    %v1825 = vunpack.c.l.b16 %v1805
    %v1826 = vunpack.c.l.b16 %v1806
    %v1827 = vunpack.c.l.b16 %v1807
    %v1828 = vunpack.c.l.b16 %v1808
    %v1829 = vunpack.c.l.b16 %v1809
    %v1830 = vunpack.c.l.b16 %v1810
    %v1831 = vunpack.c.l.b16 %v1811
    %v1832 = vpack.c.b16 %v1825, %v1824
    %v1833 = vpack.c.b16 %v1827, %v1826
    %v1834 = vpack.c.b16 %v1829, %v1828
    %v1835 = vpack.c.b16 %v1831, %v1830
    %v1841 = vsel %vm921, %v1802, 0
    %1843 = vmatprep.subr.bf16.mxu0 0
    %1844 = vmatpush1.bf16.msra.mxu0 %v1832
    %1845 = vmatprep.subr.bf16.mxu0 0
    %1846 = vmatpush1.bf16.msra.mxu0 %v1833
    %1847 = vmatprep.subr.bf16.mxu0 0
    %1848 = vmatpush1.bf16.msra.mxu0 %v1834
    %1849 = vmatprep.subr.bf16.mxu0 0
    %1850 = vmatpush1.bf16.msra.mxu0 %v1835
    %1851 = vmatprep.subr.bf16.mxu0 0
    %1852 = vmatpush1.bf16.msra.mxu0 0
    %1853 = vmatprep.subr.bf16.mxu0 0
    %1854 = vmatpush1.bf16.msra.mxu0 0
    %1855 = vmatprep.subr.bf16.mxu0 0
    %1856 = vmatpush1.bf16.msra.mxu0 0
    %1857 = vmatprep.subr.bf16.mxu0 0
    %1858 = vmatpush1.bf16.msra.mxu0 0
    %1859 = vmatprep.subr.bf16.mxu0 0
    %1860 = vmatpush1.bf16.msra.mxu0 0
    %1861 = vmatprep.subr.bf16.mxu0 0
    %1862 = vmatpush1.bf16.msra.mxu0 0
    %1863 = vmatprep.subr.bf16.mxu0 0
    %1864 = vmatpush1.bf16.msra.mxu0 0
    %1865 = vmatprep.subr.bf16.mxu0 0
    %1866 = vmatpush1.bf16.msra.mxu0 0
    %1867 = vmatprep.subr.bf16.mxu0 0
    %1868 = vmatpush1.bf16.msra.mxu0 0
    %1869 = vmatprep.subr.bf16.mxu0 0
    %1870 = vmatpush1.bf16.msra.mxu0 0
    %1871 = vmatprep.subr.bf16.mxu0 0
    %1872 = vmatpush1.bf16.msra.mxu0 0
    %1873 = vmatprep.subr.bf16.mxu0 0
    %1874 = vmatpush1.bf16.msra.mxu0 0
    %1875 = vmatprep.mubr.bf16.mxu0 0
    %1876 = vmatmul.mubr.bf16.gmra.mrb[0].mxu0 %v1841
    %v1877 = vpop.f32.mrb[0].mxu0
    %v1878 = vadd.f32 %v1815, %v1877
    %v1879 = vpop.f32.mrb[0].mxu0
    %v1880 = vpop.f32.mrb[0].mxu0
    %v1881 = vadd.f32 %v1815, %v1880
    %v1882 = vpop.f32.mrb[0].mxu0
    %1883 = vdwg.mxu0
    %v1884 = vadd.f32 %v1712, %v1878
    %v1885 = vadd.f32 %v1713, %v1881
    %v1886 = vsel %vm49, %v1884, 0.0
    %1887 = vadd.xlane.f32.xlu0 %v1886
    %v1888 = vpop.xlane.xlu0 %1887
    %v1889 = vsel %vm49, %v1885, 0.0
    %1890 = vadd.xlane.f32.xlu0 %v1889
    %v1891 = vpop.xlane.xlu0 %1890
    %v1892 = vmul.f32 %v1888, %v56
    %v1893 = vmul.f32 %v1891, %v56
    %v1894 = vsub.f32 %v1884, %v1892
    %v1895 = vsub.f32 %v1885, %v1893
    %v1896 = vmul.f32 %v1894, %v1894
    %v1897 = vmul.f32 %v1895, %v1895
    %v1898 = vsel %vm49, %v1896, 0.0
    %1899 = vadd.xlane.f32.xlu0 %v1898
    %v1900 = vpop.xlane.xlu0 %1899
    %v1901 = vsel %vm49, %v1897, 0.0
    %1902 = vadd.xlane.f32.xlu0 %v1901
    %v1903 = vpop.xlane.xlu0 %1902
    %v1904 = vmul.f32 %v1900, %v56
    %v1905 = vmul.f32 %v1903, %v56
    %v1906 = vadd.f32 %v1904, 1e-12
    %v1907 = vadd.f32 %v1905, 1e-12
    %v1908 = vrsqrt.pop %v1906
    %v1909 = vrsqrt.pop %v1907
    %v1910 = vmul.f32 %v1894, %v1908
    %v1911 = vmul.f32 %v1895, %v1909
    %v1912 = vlaneseq
    %v1913 = vshrl.u32 %v1912, 7
    %v1914 = vsub.s32 4, %v1913
    %v1915 = vrot.slane %v1007, %v1914
    %v1916 = vmul.f32 %v1910, %v1915
    %v1917 = vmul.f32 %v1911, %v1915
    %v1918 = vlaneseq
    %v1919 = vshrl.u32 %v1918, 7
    %v1920 = vsub.s32 5, %v1919
    %v1921 = vrot.slane %v1007, %v1920
    %v1922 = vadd.f32 %v1916, %v1921
    %v1923 = vadd.f32 %v1917, %v1921
    %1924 = vst.msk [vmem:[#allocation2] sm:$0xff] %vm49, %v1922
    %1925 = vst.msk [vmem:[#allocation2 + $0x8] sm:$0xff] %vm49, %v1923
    %v1926 = vld [vmem:[#allocation2] ss:$8 sm:$0x3]
    %v1927 = vpack.c.bf16 %v1926, %v1926
    %v1928 = vld [vmem:[%s10] sm:$0xf]
    %v1929 = vld [vmem:[%s10 + $0x4] sm:$0xf]
    %v1930 = vld [vmem:[%s10 + $0x8] sm:$0xf]
    %v1931 = vld [vmem:[%s10 + $0xc] sm:$0xf]
    %v1932 = vld [vmem:[%s11] sm:$0x1]
    %v1934 = vlaneseq
    %v1935 = vshrl.u32 %v1934, 7
    %v1936 = vsub.s32 0, %v1935
    %v1937 = vrot.slane %v1932, %v1936
    %v1943 = vunpack.c.l.b16 %v1928
    %v1944 = vunpack.c.l.b16 %v1929
    %v1945 = vunpack.c.l.b16 %v1930
    %v1946 = vunpack.c.l.b16 %v1931
    %v1947 = vpack.c.b16 %v1944, %v1943
    %v1948 = vpack.c.b16 %v1946, %v1945
    %v1952 = vsel %vm49, %v1927, 0
    %1954 = vmatprep.subr.bf16.mxu0 0
    %1955 = vmatpush1.bf16.msra.mxu0 %v1947
    %1956 = vmatprep.subr.bf16.mxu0 0
    %1957 = vmatpush1.bf16.msra.mxu0 %v1948
    %1958 = vmatprep.subr.bf16.mxu0 0
    %1959 = vmatpush1.bf16.msra.mxu0 0
    %1960 = vmatprep.subr.bf16.mxu0 0
    %1961 = vmatpush1.bf16.msra.mxu0 0
    %1962 = vmatprep.subr.bf16.mxu0 0
    %1963 = vmatpush1.bf16.msra.mxu0 0
    %1964 = vmatprep.subr.bf16.mxu0 0
    %1965 = vmatpush1.bf16.msra.mxu0 0
    %1966 = vmatprep.subr.bf16.mxu0 0
    %1967 = vmatpush1.bf16.msra.mxu0 0
    %1968 = vmatprep.subr.bf16.mxu0 0
    %1969 = vmatpush1.bf16.msra.mxu0 0
    %1970 = vmatprep.subr.bf16.mxu0 0
    %1971 = vmatpush1.bf16.msra.mxu0 0
    %1972 = vmatprep.subr.bf16.mxu0 0
    %1973 = vmatpush1.bf16.msra.mxu0 0
    %1974 = vmatprep.subr.bf16.mxu0 0
    %1975 = vmatpush1.bf16.msra.mxu0 0
    %1976 = vmatprep.subr.bf16.mxu0 0
    %1977 = vmatpush1.bf16.msra.mxu0 0
    %1978 = vmatprep.subr.bf16.mxu0 0
    %1979 = vmatpush1.bf16.msra.mxu0 0
    %1980 = vmatprep.subr.bf16.mxu0 0
    %1981 = vmatpush1.bf16.msra.mxu0 0
    %1982 = vmatprep.subr.bf16.mxu0 0
    %1983 = vmatpush1.bf16.msra.mxu0 0
    %1984 = vmatprep.subr.bf16.mxu0 0
    %1985 = vmatpush1.bf16.msra.mxu0 0
    %1986 = vmatprep.mubr.bf16.mxu0 0
    %1987 = vmatmul.mubr.bf16.gmra.mrb[0].mxu0 %v1952
    %v1988 = vpop.f32.mrb[0].mxu0
    %v1989 = vadd.f32 %v1937, %v1988
    %v1990 = vpop.f32.mrb[0].mxu0
    %v1991 = vpop.f32.mrb[0].mxu0
    %v1992 = vpop.f32.mrb[0].mxu0
    %1993 = vdwg.mxu0
    %v1994 = vtanh.pop %v1989
    %v1995 = vadd.f32 %v1994, %v1926
    %vm1996 = vcmask 254976
    %1997 = vst.msk [vmem:[#allocation4] sm:$0x3] %vm1996, %v1995
    // Predicated region
    $region50: #{bert_encoder_forward.1} parent=1 // pred_check
      _
    $region51: #{bert_encoder_forward.1} parent=1 // pred_check_branch
      %1999 = sbr.rel (0) target = $region53
    $region52: #{bert_encoder_forward.1} parent=1 // pred_region
      %s2001 = ssub.s32 256, 256
      %2002 = vsyncadd [#allocation3], %s2001
      %s2003 = sshll.u32 [#allocation2], 4
      %s2004 = int_to_ptr.vmem [resolvable:$true] %s2003
      %2009 = dma.vmem_to_hbm [thread:$0]  %s2004, 256, %s12, [#allocation3], 128, 128, 8
    $region53: #{bert_encoder_forward.1} parent=1 // pred_fallthru
      _
    // Predicated region
    $region54: #{bert_encoder_forward.1} parent=1 // pred_check
      _
    $region55: #{bert_encoder_forward.1} parent=1 // pred_check_branch
      %2011 = sbr.rel (0) target = $region57
    $region56: #{bert_encoder_forward.1} parent=1 // pred_region
      %s2013 = ssub.s32 32, 32
      %2014 = vsyncadd [#allocation5], %s2013
      %s2016 = sshll.u32 [#allocation4], 4
      %s2017 = int_to_ptr.vmem [resolvable:$true] %s2016
      %2019 = dma.vmem_to_hbm [thread:$0]  %s2017, 32, %s13, [#allocation5]
    $region57: #{bert_encoder_forward.1} parent=1 // pred_fallthru
      _
    // Predicated region
    $region58: #{bert_encoder_forward.1} parent=1 // pred_check
      _
    $region59: #{bert_encoder_forward.1} parent=1 // pred_check_branch
      %2021 = sbr.rel (0) target = $region61
    $region60: #{bert_encoder_forward.1} parent=1 // pred_region
      %2022 = dma.done [#allocation3], 256
    $region61: #{bert_encoder_forward.1} parent=1 // pred_fallthru
      _
    // Predicated region
    $region62: #{bert_encoder_forward.1} parent=1 // pred_check
      _
    $region63: #{bert_encoder_forward.1} parent=1 // pred_check_branch
      %2024 = sbr.rel (0) target = $region65
    $region64: #{bert_encoder_forward.1} parent=1 // pred_region
      %2025 = dma.done [#allocation5], 32
    $region65: #{bert_encoder_forward.1} parent=1 // pred_fallthru
      _
    %2026 = vsyncpa [#allocation3], 1
    %2027 = vsyncpa [#allocation5], 1

</llo_original>
